<compile_context>
chip_gen: v7x
topology: tpu7x:2x2x1
jax: 0.10.0
libtpu: 0.0.40
codegen_flags: <defaults>
</compile_context>

<pallas_src>
import math

import jax
import jax.numpy as jnp
from jax.experimental import pallas as pl
from jax.experimental.pallas import tpu as pltpu


INPUT_DIM = 784
HIDDEN_LAYERS = [512, 256, 256, 128]
OUTPUT_DIM = 10
LANE = 128


def _make_mlp_kernel(num_layers):
    """Fused MLP kernel: refs = (x, w0, b0, w1, b1, ..., w_{L-1}, b_{L-1}, out)."""

    def kernel(*refs):
        x_ref = refs[0]
        o_ref = refs[-1]
        wb = refs[1:-1]
        # bf16 operands feed the MXU at its native rate; accumulate in f32.
        h = x_ref[...].astype(jnp.bfloat16)
        for li in range(num_layers):
            w = wb[2 * li][...]          # bf16 (in, out)
            b = wb[2 * li + 1][...]      # f32  (1, out)
            acc = jnp.dot(h, w, preferred_element_type=jnp.float32) + b
            if li != num_layers - 1:
                # activation_function (ReLU as the concrete instance), in f32.
                acc = jnp.maximum(acc, 0.0)
                h = acc.astype(jnp.bfloat16)
            else:
                h = acc
        o_ref[...] = h.astype(o_ref.dtype)

    return kernel


def init_params(key, input_dim=INPUT_DIM, hidden=HIDDEN_LAYERS,
                output_dim=OUTPUT_DIM, weight_dtype=jnp.bfloat16,
                bias_dtype=jnp.float32):
    """PyTorch-style nn.Linear init: U(-1/sqrt(fan_in), 1/sqrt(fan_in)).

    Weights are stored as (in, out) so the kernel computes x @ W + b.  The
    last layer is zero-padded to a 128-lane-multiple output width (lane-dense
    stores); the wrapper slices the real `output_dim` columns back out.
    """
    dims = [input_dim] + list(hidden) + [output_dim]
    params = []
    for i in range(len(dims) - 1):
        key, kw, kb = jax.random.split(key, 3)
        fan_in, fan_out = dims[i], dims[i + 1]
        bound = 1.0 / math.sqrt(fan_in)
        w = jax.random.uniform(kw, (fan_in, fan_out), jnp.float32, -bound, bound)
        b = jax.random.uniform(kb, (1, fan_out), jnp.float32, -bound, bound)
        if i == len(dims) - 2 and fan_out % LANE != 0:
            padded = ((fan_out + LANE - 1) // LANE) * LANE
            w = jnp.pad(w, ((0, 0), (0, padded - fan_out)))
            b = jnp.pad(b, ((0, 0), (0, padded - fan_out)))
        params.append((w.astype(weight_dtype), b.astype(bias_dtype)))
    return params


def base_network_forward(x, params, *, out_dim=OUTPUT_DIM, batch_tile=512):
    """Forward pass of BaseNetwork: flatten, then fused Linear/activation stack."""
    batch = x.shape[0]
    x2 = x.reshape(batch, -1)                      # x.view(x.size(0), -1)
    in_dim = x2.shape[1]
    num_layers = len(params)
    dtype = x2.dtype
    padded_out = params[-1][0].shape[1]            # lane-dense output width (128)

    # Batch tile: full extent for small batches (no (8,128) issues), otherwise
    # a 512-row tile; the ragged last block (if any) is masked by Pallas — no
    # wrapper-side jnp.pad / extra HBM pass.
    bt = batch if batch <= batch_tile else batch_tile
    grid = (pl.cdiv(batch, bt),)

    in_specs = [pl.BlockSpec((bt, in_dim), lambda i: (i, 0))]
    flat_args = [x2]
    flops = 0
    bytes_accessed = x2.size * x2.dtype.itemsize
    for (w, b) in params:
        # Weights / biases: full-extent blocks with a constant index map, so
        # they stay resident in VMEM across every grid step.
        in_specs.append(pl.BlockSpec(w.shape, lambda i: (0, 0)))
        in_specs.append(pl.BlockSpec(b.shape, lambda i: (0, 0)))
        flat_args.append(w)
        flat_args.append(b)
        flops += 2 * batch * w.shape[0] * w.shape[1]
        bytes_accessed += w.size * w.dtype.itemsize + b.size * b.dtype.itemsize
    bytes_accessed += batch * padded_out * x2.dtype.itemsize

    out = pl.pallas_call(
        _make_mlp_kernel(num_layers),
        out_shape=jax.ShapeDtypeStruct((batch, padded_out), dtype),
        grid_spec=pltpu.PrefetchScalarGridSpec(
            num_scalar_prefetch=0,
            grid=grid,
            in_specs=in_specs,
            out_specs=pl.BlockSpec((bt, padded_out), lambda i: (i, 0)),
        ),
        compiler_params=pltpu.CompilerParams(
            dimension_semantics=("parallel",),
            vmem_limit_bytes=48 * 1024 * 1024,
        ),
        cost_estimate=pl.CostEstimate(
            flops=flops, transcendentals=0, bytes_accessed=bytes_accessed),
    )(*flat_args)

    return out[:, :out_dim] if padded_out != out_dim else out


if __name__ == "__main__":
    key = jax.random.PRNGKey(0)
    kx, kp = jax.random.split(key)

    # batch=2, MNIST-like input that flattens to input_dim=784.
    x = jax.random.normal(kx, (2, 1, 28, 28), dtype=jnp.float32)
    params = init_params(kp)

    y = base_network_forward(x, params)
    jax.block_until_ready(y)

    # Pure-JAX f32 reference of the same forward pass (weights are the same
    # bf16-stored values, upcast; kernel additionally rounds activations to
    # bf16 before each matmul — covered by the 2e-2 tolerance).
    h = x.reshape(x.shape[0], -1)
    for i, (w, b) in enumerate(params):
        h = h @ w.astype(jnp.float32) + b.astype(jnp.float32)
        if i != len(params) - 1:
            h = jnp.maximum(h, 0.0)
    ref = h[:, :OUTPUT_DIM]

    assert y.shape == (2, OUTPUT_DIM)
    assert y.dtype == x.dtype
    assert bool(jnp.allclose(y, ref, rtol=2e-2, atol=2e-2))

    print("KERNEL_OK")
</pallas_src>

<mosaic_0001>
module attributes {stable_mosaic.version = 11 : i64} {
  func.func @kernel(%arg0: i32, %arg1: memref<2x784xf32, #tpu.memory_space<vmem>>, %arg2: memref<784x512xbf16, #tpu.memory_space<vmem>>, %arg3: memref<1x512xf32, #tpu.memory_space<vmem>>, %arg4: memref<512x256xbf16, #tpu.memory_space<vmem>>, %arg5: memref<1x256xf32, #tpu.memory_space<vmem>>, %arg6: memref<256x256xbf16, #tpu.memory_space<vmem>>, %arg7: memref<1x256xf32, #tpu.memory_space<vmem>>, %arg8: memref<256x128xbf16, #tpu.memory_space<vmem>>, %arg9: memref<1x128xf32, #tpu.memory_space<vmem>>, %arg10: memref<128x128xbf16, #tpu.memory_space<vmem>>, %arg11: memref<1x128xf32, #tpu.memory_space<vmem>>, %arg12: memref<2x128xf32, #tpu.memory_space<vmem>>) attributes {dimension_semantics = [#tpu.dimension_semantics<parallel>], iteration_bounds = array<i64: 1>, scalar_prefetch = 0 : i64, scratch_operands = 0 : i64, tpu.core_type = #tpu.core_type<tc>, window_params = [{transform_indices = @transform_0, window_bounds = array<i64: 2, 784>}, {pipeline_mode = #tpu.pipeline_mode<synchronous>, transform_indices = @transform_1, window_bounds = array<i64: 784, 512>}, {pipeline_mode = #tpu.pipeline_mode<synchronous>, transform_indices = @transform_2, window_bounds = array<i64: 1, 512>}, {pipeline_mode = #tpu.pipeline_mode<synchronous>, transform_indices = @transform_3, window_bounds = array<i64: 512, 256>}, {pipeline_mode = #tpu.pipeline_mode<synchronous>, transform_indices = @transform_4, window_bounds = array<i64: 1, 256>}, {pipeline_mode = #tpu.pipeline_mode<synchronous>, transform_indices = @transform_5, window_bounds = array<i64: 256, 256>}, {pipeline_mode = #tpu.pipeline_mode<synchronous>, transform_indices = @transform_6, window_bounds = array<i64: 1, 256>}, {pipeline_mode = #tpu.pipeline_mode<synchronous>, transform_indices = @transform_7, window_bounds = array<i64: 256, 128>}, {pipeline_mode = #tpu.pipeline_mode<synchronous>, transform_indices = @transform_8, window_bounds = array<i64: 1, 128>}, {pipeline_mode = #tpu.pipeline_mode<synchronous>, transform_indices = @transform_9, window_bounds = array<i64: 128, 128>}, {pipeline_mode = #tpu.pipeline_mode<synchronous>, transform_indices = @transform_10, window_bounds = array<i64: 1, 128>}, {transform_indices = @transform_11, window_bounds = array<i64: 2, 128>}]} {
    %c0 = arith.constant 0 : index
    %c0_0 = arith.constant 0 : index
    %0 = vector.load %arg1[%c0, %c0_0] : memref<2x784xf32, #tpu.memory_space<vmem>>, vector<2x784xf32>
    %1 = arith.truncf %0 : vector<2x784xf32> to vector<2x784xbf16>
    %c0_1 = arith.constant 0 : index
    %c0_2 = arith.constant 0 : index
    %2 = vector.load %arg2[%c0_1, %c0_2] : memref<784x512xbf16, #tpu.memory_space<vmem>>, vector<784x512xbf16>
    %c0_3 = arith.constant 0 : index
    %c0_4 = arith.constant 0 : index
    %3 = vector.load %arg3[%c0_3, %c0_4] : memref<1x512xf32, #tpu.memory_space<vmem>>, vector<1x512xf32>
    %cst = arith.constant dense<0.000000e+00> : vector<2x512xf32>
    %4 = tpu.matmul %1, %2, %cst {dimension_numbers = #tpu.dot_dimension_numbers<[1], [0], [0], [1], [0, 0, 1, 1], [], []>} : vector<2x784xbf16>, vector<784x512xbf16>, vector<2x512xf32> -> vector<2x512xf32>
    %5 = vector.broadcast %3 : vector<1x512xf32> to vector<2x512xf32>
    %6 = arith.addf %4, %5 : vector<2x512xf32>
    %cst_5 = arith.constant 0.000000e+00 : f32
    %7 = vector.broadcast %cst_5 : f32 to vector<2x512xf32>
    %8 = arith.maximumf %6, %7 : vector<2x512xf32>
    %9 = arith.truncf %8 : vector<2x512xf32> to vector<2x512xbf16>
    %c0_6 = arith.constant 0 : index
    %c0_7 = arith.constant 0 : index
    %10 = vector.load %arg4[%c0_6, %c0_7] : memref<512x256xbf16, #tpu.memory_space<vmem>>, vector<512x256xbf16>
    %c0_8 = arith.constant 0 : index
    %c0_9 = arith.constant 0 : index
    %11 = vector.load %arg5[%c0_8, %c0_9] : memref<1x256xf32, #tpu.memory_space<vmem>>, vector<1x256xf32>
    %cst_10 = arith.constant dense<0.000000e+00> : vector<2x256xf32>
    %12 = tpu.matmul %9, %10, %cst_10 {dimension_numbers = #tpu.dot_dimension_numbers<[1], [0], [0], [1], [0, 0, 1, 1], [], []>} : vector<2x512xbf16>, vector<512x256xbf16>, vector<2x256xf32> -> vector<2x256xf32>
    %13 = vector.broadcast %11 : vector<1x256xf32> to vector<2x256xf32>
    %14 = arith.addf %12, %13 : vector<2x256xf32>
    %cst_11 = arith.constant 0.000000e+00 : f32
    %15 = vector.broadcast %cst_11 : f32 to vector<2x256xf32>
    %16 = arith.maximumf %14, %15 : vector<2x256xf32>
    %17 = arith.truncf %16 : vector<2x256xf32> to vector<2x256xbf16>
    %c0_12 = arith.constant 0 : index
    %c0_13 = arith.constant 0 : index
    %18 = vector.load %arg6[%c0_12, %c0_13] : memref<256x256xbf16, #tpu.memory_space<vmem>>, vector<256x256xbf16>
    %c0_14 = arith.constant 0 : index
    %c0_15 = arith.constant 0 : index
    %19 = vector.load %arg7[%c0_14, %c0_15] : memref<1x256xf32, #tpu.memory_space<vmem>>, vector<1x256xf32>
    %cst_16 = arith.constant dense<0.000000e+00> : vector<2x256xf32>
    %20 = tpu.matmul %17, %18, %cst_16 {dimension_numbers = #tpu.dot_dimension_numbers<[1], [0], [0], [1], [0, 0, 1, 1], [], []>} : vector<2x256xbf16>, vector<256x256xbf16>, vector<2x256xf32> -> vector<2x256xf32>
    %21 = vector.broadcast %19 : vector<1x256xf32> to vector<2x256xf32>
    %22 = arith.addf %20, %21 : vector<2x256xf32>
    %cst_17 = arith.constant 0.000000e+00 : f32
    %23 = vector.broadcast %cst_17 : f32 to vector<2x256xf32>
    %24 = arith.maximumf %22, %23 : vector<2x256xf32>
    %25 = arith.truncf %24 : vector<2x256xf32> to vector<2x256xbf16>
    %c0_18 = arith.constant 0 : index
    %c0_19 = arith.constant 0 : index
    %26 = vector.load %arg8[%c0_18, %c0_19] : memref<256x128xbf16, #tpu.memory_space<vmem>>, vector<256x128xbf16>
    %c0_20 = arith.constant 0 : index
    %c0_21 = arith.constant 0 : index
    %27 = vector.load %arg9[%c0_20, %c0_21] : memref<1x128xf32, #tpu.memory_space<vmem>>, vector<1x128xf32>
    %cst_22 = arith.constant dense<0.000000e+00> : vector<2x128xf32>
    %28 = tpu.matmul %25, %26, %cst_22 {dimension_numbers = #tpu.dot_dimension_numbers<[1], [0], [0], [1], [0, 0, 1, 1], [], []>} : vector<2x256xbf16>, vector<256x128xbf16>, vector<2x128xf32> -> vector<2x128xf32>
    %29 = vector.broadcast %27 : vector<1x128xf32> to vector<2x128xf32>
    %30 = arith.addf %28, %29 : vector<2x128xf32>
    %cst_23 = arith.constant 0.000000e+00 : f32
    %31 = vector.broadcast %cst_23 : f32 to vector<2x128xf32>
    %32 = arith.maximumf %30, %31 : vector<2x128xf32>
    %33 = arith.truncf %32 : vector<2x128xf32> to vector<2x128xbf16>
    %c0_24 = arith.constant 0 : index
    %c0_25 = arith.constant 0 : index
    %34 = vector.load %arg10[%c0_24, %c0_25] : memref<128x128xbf16, #tpu.memory_space<vmem>>, vector<128x128xbf16>
    %c0_26 = arith.constant 0 : index
    %c0_27 = arith.constant 0 : index
    %35 = vector.load %arg11[%c0_26, %c0_27] : memref<1x128xf32, #tpu.memory_space<vmem>>, vector<1x128xf32>
    %cst_28 = arith.constant dense<0.000000e+00> : vector<2x128xf32>
    %36 = tpu.matmul %33, %34, %cst_28 {dimension_numbers = #tpu.dot_dimension_numbers<[1], [0], [0], [1], [0, 0, 1, 1], [], []>} : vector<2x128xbf16>, vector<128x128xbf16>, vector<2x128xf32> -> vector<2x128xf32>
    %37 = vector.broadcast %35 : vector<1x128xf32> to vector<2x128xf32>
    %38 = arith.addf %36, %37 : vector<2x128xf32>
    %c0_29 = arith.constant 0 : index
    %c0_30 = arith.constant 0 : index
    %39 = vector.load %arg12[%c0_29, %c0_30] : memref<2x128xf32, #tpu.memory_space<vmem>>, vector<2x128xf32>
    tpu.vector_store %arg12[%c0_29, %c0_30], %38 {strides = array<i32>} : memref<2x128xf32, #tpu.memory_space<vmem>>, vector<2x128xf32>,
    return
  }
  func.func @transform_0(%arg0: i32) -> (i32, i32) {
    %c0_i32 = arith.constant 0 : i32
    %c0_i32_0 = arith.constant 0 : i32
    return %arg0, %c0_i32 : i32, i32
  }
  func.func @transform_1(%arg0: i32) -> (i32, i32) {
    %c0_i32 = arith.constant 0 : i32
    %c0_i32_0 = arith.constant 0 : i32
    %c0_i32_1 = arith.constant 0 : i32
    return %c0_i32, %c0_i32_0 : i32, i32
  }
  func.func @transform_2(%arg0: i32) -> (i32, i32) {
    %c0_i32 = arith.constant 0 : i32
    %c0_i32_0 = arith.constant 0 : i32
    %c0_i32_1 = arith.constant 0 : i32
    return %c0_i32, %c0_i32_0 : i32, i32
  }
  func.func @transform_3(%arg0: i32) -> (i32, i32) {
    %c0_i32 = arith.constant 0 : i32
    %c0_i32_0 = arith.constant 0 : i32
    %c0_i32_1 = arith.constant 0 : i32
    return %c0_i32, %c0_i32_0 : i32, i32
  }
  func.func @transform_4(%arg0: i32) -> (i32, i32) {
    %c0_i32 = arith.constant 0 : i32
    %c0_i32_0 = arith.constant 0 : i32
    %c0_i32_1 = arith.constant 0 : i32
    return %c0_i32, %c0_i32_0 : i32, i32
  }
  func.func @transform_5(%arg0: i32) -> (i32, i32) {
    %c0_i32 = arith.constant 0 : i32
    %c0_i32_0 = arith.constant 0 : i32
    %c0_i32_1 = arith.constant 0 : i32
    return %c0_i32, %c0_i32_0 : i32, i32
  }
  func.func @transform_6(%arg0: i32) -> (i32, i32) {
    %c0_i32 = arith.constant 0 : i32
    %c0_i32_0 = arith.constant 0 : i32
    %c0_i32_1 = arith.constant 0 : i32
    return %c0_i32, %c0_i32_0 : i32, i32
  }
  func.func @transform_7(%arg0: i32) -> (i32, i32) {
    %c0_i32 = arith.constant 0 : i32
    %c0_i32_0 = arith.constant 0 : i32
    %c0_i32_1 = arith.constant 0 : i32
    return %c0_i32, %c0_i32_0 : i32, i32
  }
  func.func @transform_8(%arg0: i32) -> (i32, i32) {
    %c0_i32 = arith.constant 0 : i32
    %c0_i32_0 = arith.constant 0 : i32
    %c0_i32_1 = arith.constant 0 : i32
    return %c0_i32, %c0_i32_0 : i32, i32
  }
  func.func @transform_9(%arg0: i32) -> (i32, i32) {
    %c0_i32 = arith.constant 0 : i32
    %c0_i32_0 = arith.constant 0 : i32
    %c0_i32_1 = arith.constant 0 : i32
    return %c0_i32, %c0_i32_0 : i32, i32
  }
  func.func @transform_10(%arg0: i32) -> (i32, i32) {
    %c0_i32 = arith.constant 0 : i32
    %c0_i32_0 = arith.constant 0 : i32
    %c0_i32_1 = arith.constant 0 : i32
    return %c0_i32, %c0_i32_0 : i32, i32
  }
  func.func @transform_11(%arg0: i32) -> (i32, i32) {
    %c0_i32 = arith.constant 0 : i32
    %c0_i32_0 = arith.constant 0 : i32
    return %arg0, %c0_i32 : i32, i32
  }
}

</mosaic_0001>

<llo_original>
// kernel: tpu_custom_call.1
$region0: #{tpu_custom_call.1}
  #allocation0 [shape = 'u32[]', space=smem, size = 0x4, offset = 0x4, fixed_abs, tag = 'smem constant byte address 0x4 - core index']
  #allocation1 [shape = 'u32[144,128]{1,0:T(1,128)}', space=vmem, size = 0x12000, scoped, tag = 'internal scratch']
  %s0 = inlined_call_operand.hbm [shape: f32[2,784], index: 0, kind: input, shape index: {}]
  %s1 = inlined_call_operand.hbm [shape: bf16[784,512], index: 1, kind: input, shape index: {}]
  %s2 = inlined_call_operand.vmem [shape: f32[1,512], index: 2, kind: input, shape index: {}]
  %s3 = inlined_call_operand.hbm [shape: bf16[512,256], index: 3, kind: input, shape index: {}]
  %s4 = inlined_call_operand.vmem [shape: f32[1,256], index: 4, kind: input, shape index: {}]
  %s5 = inlined_call_operand.hbm [shape: bf16[256,256], index: 5, kind: input, shape index: {}]
  %s6 = inlined_call_operand.vmem [shape: f32[1,256], index: 6, kind: input, shape index: {}]
  %s7 = inlined_call_operand.hbm [shape: bf16[256,128], index: 7, kind: input, shape index: {}]
  %s8 = inlined_call_operand.vmem [shape: f32[1,128], index: 8, kind: input, shape index: {}]
  %s9 = inlined_call_operand.hbm [shape: bf16[128,128], index: 9, kind: input, shape index: {}]
  %s10 = inlined_call_operand.vmem [shape: f32[1,128], index: 10, kind: input, shape index: {}]
  %s11 = inlined_call_operand.hbm [shape: f32[2,128], index: 11, kind: output, shape index: {}]
  %s12 = sld [smem:[#allocation0]]
  $region78: #{tpu_custom_call.1} parent=0
    _
  %s14 = ssub.s32 1, %s12
  %s15 = scalar_select 0, %s14, %s12
  $region1: #{tpu_custom_call.1} parent=0
    #allocation2 [shape = 'u8[7168]{0}', space=vmem, size = 0x1c00, scoped, tag = 'input window, operand 0, single buffered']
    #allocation3 [shape = 's32[1]{0}', space=sflag, size = 0x4, scoped, tag = 'scoped memory for tpu_custom_call.1']
    #allocation4 [shape = 's32[1]{0}', space=sflag, size = 0x4, scoped, tag = 'scoped memory for tpu_custom_call.1']
    #allocation5 [shape = 'u8[802816]{0}', space=vmem, size = 0xc4000, scoped, tag = 'input window, operand 1, single buffered']
    #allocation6 [shape = 's32[1]{0}', space=sflag, size = 0x4, scoped, tag = 'scoped memory for tpu_custom_call.1']
    #allocation7 [shape = 'u8[262144]{0}', space=vmem, size = 0x40000, scoped, tag = 'input window, operand 3, single buffered']
    #allocation8 [shape = 'u8[131072]{0}', space=vmem, size = 0x20000, scoped, tag = 'input window, operand 5, single buffered']
    #allocation9 [shape = 's32[1]{0}', space=sflag, size = 0x4, scoped, tag = 'scoped memory for tpu_custom_call.1']
    #allocation10 [shape = 'u8[65536]{0}', space=vmem, size = 0x10000, scoped, tag = 'input window, operand 7, single buffered']
    #allocation11 [shape = 'u8[32768]{0}', space=vmem, size = 0x8000, scoped, tag = 'input window, operand 9, single buffered']
    #allocation12 [shape = 's32[1]{0}', space=sflag, size = 0x4, scoped, tag = 'scoped memory for tpu_custom_call.1']
    #allocation13 [shape = 'u8[1024]{0}', space=vmem, size = 0x400, scoped, tag = 'output window, operand 0, single buffered']
    %16 = vsyncpa [#allocation3], 0
    %17 = vsyncpa [#allocation6], 0
    %18 = vsyncpa [#allocation9], 0
    %19 = vsyncpa [#allocation12], 0
    %20 = vsyncpa [#allocation4], 0
    // Predicated region
    $region2: #{tpu_custom_call.1} parent=1 // pred_check
      _
    $region3: #{tpu_custom_call.1} parent=1 // pred_check_branch
      %22 = sbr.rel (0) target = $region5
    $region4: #{tpu_custom_call.1} parent=1 // pred_region
      %s24 = ssub.s32 224, 224
      %25 = vsyncadd [#allocation3], %s24
      %s27 = sshll.u32 [#allocation2], 4
      %s28 = int_to_ptr.vmem [resolvable:$true] %s27
      %30 = dma.hbm_to_vmem [thread:$0]  %s0, 224, %s28, [#allocation3]
    $region5: #{tpu_custom_call.1} parent=1 // pred_fallthru
      _
    // Predicated region
    $region6: #{tpu_custom_call.1} parent=1 // pred_check
      _
    $region7: #{tpu_custom_call.1} parent=1 // pred_check_branch
      %32 = sbr.rel (0) target = $region9
    $region8: #{tpu_custom_call.1} parent=1 // pred_region
      %s34 = ssub.s32 25088, 25088
      %35 = vsyncadd [#allocation6], %s34
      %s36 = sshll.u32 [#allocation5], 4
      %s37 = int_to_ptr.vmem [resolvable:$true] %s36
      %42 = dma.hbm_to_vmem [thread:$0]  %s1, 25088, %s37, [#allocation6], 256, 256, 16
    $region9: #{tpu_custom_call.1} parent=1 // pred_fallthru
      _
    // Predicated region
    $region10: #{tpu_custom_call.1} parent=1 // pred_check
      _
    $region11: #{tpu_custom_call.1} parent=1 // pred_check_branch
      %44 = sbr.rel (0) target = $region13
    $region12: #{tpu_custom_call.1} parent=1 // pred_region
      _
    $region13: #{tpu_custom_call.1} parent=1 // pred_fallthru
      _
    // Predicated region
    $region14: #{tpu_custom_call.1} parent=1 // pred_check
      _
    $region15: #{tpu_custom_call.1} parent=1 // pred_check_branch
      %46 = sbr.rel (0) target = $region17
    $region16: #{tpu_custom_call.1} parent=1 // pred_region
      %s48 = ssub.s32 8192, 8192
      %49 = vsyncadd [#allocation6], %s48
      %s50 = sshll.u32 [#allocation7], 4
      %s51 = int_to_ptr.vmem [resolvable:$true] %s50
      %56 = dma.hbm_to_vmem [thread:$0]  %s3, 8192, %s51, [#allocation6], 128, 128, 8
    $region17: #{tpu_custom_call.1} parent=1 // pred_fallthru
      _
    // Predicated region
    $region18: #{tpu_custom_call.1} parent=1 // pred_check
      _
    $region19: #{tpu_custom_call.1} parent=1 // pred_check_branch
      %58 = sbr.rel (0) target = $region21
    $region20: #{tpu_custom_call.1} parent=1 // pred_region
      _
    $region21: #{tpu_custom_call.1} parent=1 // pred_fallthru
      _
    // Predicated region
    $region22: #{tpu_custom_call.1} parent=1 // pred_check
      _
    $region23: #{tpu_custom_call.1} parent=1 // pred_check_branch
      %60 = sbr.rel (0) target = $region25
    $region24: #{tpu_custom_call.1} parent=1 // pred_region
      %s62 = ssub.s32 4096, 4096
      %63 = vsyncadd [#allocation9], %s62
      %s64 = sshll.u32 [#allocation8], 4
      %s65 = int_to_ptr.vmem [resolvable:$true] %s64
      %70 = dma.hbm_to_vmem [thread:$0]  %s5, 4096, %s65, [#allocation9], 128, 128, 8
    $region25: #{tpu_custom_call.1} parent=1 // pred_fallthru
      _
    // Predicated region
    $region26: #{tpu_custom_call.1} parent=1 // pred_check
      _
    $region27: #{tpu_custom_call.1} parent=1 // pred_check_branch
      %72 = sbr.rel (0) target = $region29
    $region28: #{tpu_custom_call.1} parent=1 // pred_region
      _
    $region29: #{tpu_custom_call.1} parent=1 // pred_fallthru
      _
    // Predicated region
    $region30: #{tpu_custom_call.1} parent=1 // pred_check
      _
    $region31: #{tpu_custom_call.1} parent=1 // pred_check_branch
      %74 = sbr.rel (0) target = $region33
    $region32: #{tpu_custom_call.1} parent=1 // pred_region
      %s76 = ssub.s32 2048, 2048
      %77 = vsyncadd [#allocation9], %s76
      %s78 = sshll.u32 [#allocation10], 4
      %s79 = int_to_ptr.vmem [resolvable:$true] %s78
      %84 = dma.hbm_to_vmem [thread:$0]  %s7, 2048, %s79, [#allocation9], 64, 64, 4
    $region33: #{tpu_custom_call.1} parent=1 // pred_fallthru
      _
    // Predicated region
    $region34: #{tpu_custom_call.1} parent=1 // pred_check
      _
    $region35: #{tpu_custom_call.1} parent=1 // pred_check_branch
      %86 = sbr.rel (0) target = $region37
    $region36: #{tpu_custom_call.1} parent=1 // pred_region
      _
    $region37: #{tpu_custom_call.1} parent=1 // pred_fallthru
      _
    // Predicated region
    $region38: #{tpu_custom_call.1} parent=1 // pred_check
      _
    $region39: #{tpu_custom_call.1} parent=1 // pred_check_branch
      %88 = sbr.rel (0) target = $region41
    $region40: #{tpu_custom_call.1} parent=1 // pred_region
      %s90 = ssub.s32 1024, 1024
      %91 = vsyncadd [#allocation12], %s90
      %s92 = sshll.u32 [#allocation11], 4
      %s93 = int_to_ptr.vmem [resolvable:$true] %s92
      %98 = dma.hbm_to_vmem [thread:$0]  %s9, 1024, %s93, [#allocation12], 64, 64, 4
    $region41: #{tpu_custom_call.1} parent=1 // pred_fallthru
      _
    // Predicated region
    $region42: #{tpu_custom_call.1} parent=1 // pred_check
      _
    $region43: #{tpu_custom_call.1} parent=1 // pred_check_branch
      %100 = sbr.rel (0) target = $region45
    $region44: #{tpu_custom_call.1} parent=1 // pred_region
      _
    $region45: #{tpu_custom_call.1} parent=1 // pred_fallthru
      _
    // Predicated region
    $region46: #{tpu_custom_call.1} parent=1 // pred_check
      _
    $region47: #{tpu_custom_call.1} parent=1 // pred_check_branch
      %102 = sbr.rel (0) target = $region49
    $region48: #{tpu_custom_call.1} parent=1 // pred_region
      %103 = dma.done [#allocation3], 224
    $region49: #{tpu_custom_call.1} parent=1 // pred_fallthru
      _
    // Predicated region
    $region50: #{tpu_custom_call.1} parent=1 // pred_check
      _
    $region51: #{tpu_custom_call.1} parent=1 // pred_check_branch
      %105 = sbr.rel (0) target = $region53
    $region52: #{tpu_custom_call.1} parent=1 // pred_region
      %106 = dma.done [#allocation6], 25088
    $region53: #{tpu_custom_call.1} parent=1 // pred_fallthru
      _
    // Predicated region
    $region54: #{tpu_custom_call.1} parent=1 // pred_check
      _
    $region55: #{tpu_custom_call.1} parent=1 // pred_check_branch
      %108 = sbr.rel (0) target = $region57
    $region56: #{tpu_custom_call.1} parent=1 // pred_region
      %109 = dma.done [#allocation6], 8192
    $region57: #{tpu_custom_call.1} parent=1 // pred_fallthru
      _
    // Predicated region
    $region58: #{tpu_custom_call.1} parent=1 // pred_check
      _
    $region59: #{tpu_custom_call.1} parent=1 // pred_check_branch
      %111 = sbr.rel (0) target = $region61
    $region60: #{tpu_custom_call.1} parent=1 // pred_region
      %112 = dma.done [#allocation9], 4096
    $region61: #{tpu_custom_call.1} parent=1 // pred_fallthru
      _
    // Predicated region
    $region62: #{tpu_custom_call.1} parent=1 // pred_check
      _
    $region63: #{tpu_custom_call.1} parent=1 // pred_check_branch
      %114 = sbr.rel (0) target = $region65
    $region64: #{tpu_custom_call.1} parent=1 // pred_region
      %115 = dma.done [#allocation9], 2048
    $region65: #{tpu_custom_call.1} parent=1 // pred_fallthru
      _
    // Predicated region
    $region66: #{tpu_custom_call.1} parent=1 // pred_check
      _
    $region67: #{tpu_custom_call.1} parent=1 // pred_check_branch
      %117 = sbr.rel (0) target = $region69
    $region68: #{tpu_custom_call.1} parent=1 // pred_region
      %118 = dma.done [#allocation12], 1024
    $region69: #{tpu_custom_call.1} parent=1 // pred_fallthru
      _
    %v120 = vld [vmem:[#allocation2] sm:$0xff]
    %v121 = vld [vmem:[#allocation2 + $0x8] sm:$0x3f]
    %v124 = vcombine.high %v120, %v120
    %v126 = vunpack.c.l.s4 1983009808
    %v127 = vunpack.c.0.s8 %v126
    %v128 = vlaneseq
    %v129 = vshrl.u32 %v128, 7
    %v130 = vsub.s32 %v127, %v129
    %v131 = vrot.slane %v120, %v130
    %v133 = vunpack.c.l.s4 1983009808
    %v134 = vunpack.c.0.s8 %v133
    %v135 = vlaneseq
    %v136 = vshrl.u32 %v135, 7
    %v137 = vsub.s32 %v134, %v136
    %v138 = vrot.slane %v124, %v137
    %v139 = vcombine.high %v131, %v131
    %v140 = vcombine.high %v138, %v138
    %v141 = vcombine.high %v121, %v121
    %v143 = vunpack.c.l.s4 1983009808
    %v144 = vunpack.c.0.s8 %v143
    %v145 = vlaneseq
    %v146 = vshrl.u32 %v145, 7
    %v147 = vsub.s32 %v144, %v146
    %v148 = vrot.slane %v121, %v147
    %v150 = vunpack.c.l.s4 1983009808
    %v151 = vunpack.c.0.s8 %v150
    %v152 = vlaneseq
    %v153 = vshrl.u32 %v152, 7
    %v154 = vsub.s32 %v151, %v153
    %v155 = vrot.slane %v141, %v154
    %v156 = vcombine.high %v148, %v148
    %v164 = vpack.c.bf16 %v131, %v131
    %v165 = vpack.c.bf16 %v139, %v139
    %v166 = vpack.c.bf16 %v138, %v138
    %v167 = vpack.c.bf16 %v140, %v140
    %v168 = vpack.c.bf16 %v148, %v148
    %v169 = vpack.c.bf16 %v156, %v156
    %v170 = vpack.c.bf16 %v155, %v155
    %v171 = vld [vmem:[#allocation5] sm:$0xff]
    %v172 = vld [vmem:[#allocation5 + $0x8] sm:$0xff]
    %v173 = vld [vmem:[#allocation5 + $0x10] sm:$0xff]
    %v174 = vld [vmem:[#allocation5 + $0x18] sm:$0xff]
    %v175 = vld [vmem:[#allocation5 + $0x20] sm:$0xff]
    %v176 = vld [vmem:[#allocation5 + $0x28] sm:$0xff]
    %v177 = vld [vmem:[#allocation5 + $0x30] sm:$0xff]
    %v178 = vld [vmem:[#allocation5 + $0x38] sm:$0xff]
    %v179 = vld [vmem:[#allocation5 + $0x40] sm:$0xff]
    %v180 = vld [vmem:[#allocation5 + $0x48] sm:$0xff]
    %v181 = vld [vmem:[#allocation5 + $0x50] sm:$0xff]
    %v182 = vld [vmem:[#allocation5 + $0x58] sm:$0xff]
    %v183 = vld [vmem:[#allocation5 + $0x60] sm:$0xff]
    %v184 = vld [vmem:[#allocation5 + $0x68] sm:$0xff]
    %v185 = vld [vmem:[#allocation5 + $0x70] sm:$0xff]
    %v186 = vld [vmem:[#allocation5 + $0x78] sm:$0xff]
    %v187 = vld [vmem:[#allocation5 + $0x80] sm:$0xff]
    %v188 = vld [vmem:[#allocation5 + $0x88] sm:$0xff]
    %v189 = vld [vmem:[#allocation5 + $0x90] sm:$0xff]
    %v190 = vld [vmem:[#allocation5 + $0x98] sm:$0xff]
    %v191 = vld [vmem:[#allocation5 + $0xa0] sm:$0xff]
    %v192 = vld [vmem:[#allocation5 + $0xa8] sm:$0xff]
    %v193 = vld [vmem:[#allocation5 + $0xb0] sm:$0xff]
    %v194 = vld [vmem:[#allocation5 + $0xb8] sm:$0xff]
    %v195 = vld [vmem:[#allocation5 + $0xc0] sm:$0xff]
    %v196 = vld [vmem:[#allocation5 + $0xc8] sm:$0xff]
    %v197 = vld [vmem:[#allocation5 + $0xd0] sm:$0xff]
    %v198 = vld [vmem:[#allocation5 + $0xd8] sm:$0xff]
    %v199 = vld [vmem:[#allocation5 + $0xe0] sm:$0xff]
    %v200 = vld [vmem:[#allocation5 + $0xe8] sm:$0xff]
    %v201 = vld [vmem:[#allocation5 + $0xf0] sm:$0xff]
    %v202 = vld [vmem:[#allocation5 + $0xf8] sm:$0xff]
    %v203 = vld [vmem:[#allocation5 + $0x100] sm:$0xff]
    %v204 = vld [vmem:[#allocation5 + $0x108] sm:$0xff]
    %v205 = vld [vmem:[#allocation5 + $0x110] sm:$0xff]
    %v206 = vld [vmem:[#allocation5 + $0x118] sm:$0xff]
    %v207 = vld [vmem:[#allocation5 + $0x120] sm:$0xff]
    %v208 = vld [vmem:[#allocation5 + $0x128] sm:$0xff]
    %v209 = vld [vmem:[#allocation5 + $0x130] sm:$0xff]
    %v210 = vld [vmem:[#allocation5 + $0x138] sm:$0xff]
    %v211 = vld [vmem:[#allocation5 + $0x140] sm:$0xff]
    %v212 = vld [vmem:[#allocation5 + $0x148] sm:$0xff]
    %v213 = vld [vmem:[#allocation5 + $0x150] sm:$0xff]
    %v214 = vld [vmem:[#allocation5 + $0x158] sm:$0xff]
    %v215 = vld [vmem:[#allocation5 + $0x160] sm:$0xff]
    %v216 = vld [vmem:[#allocation5 + $0x168] sm:$0xff]
    %v217 = vld [vmem:[#allocation5 + $0x170] sm:$0xff]
    %v218 = vld [vmem:[#allocation5 + $0x178] sm:$0xff]
    %v219 = vld [vmem:[#allocation5 + $0x180] sm:$0xff]
    %v220 = vld [vmem:[#allocation5 + $0x188] sm:$0xff]
    %v221 = vld [vmem:[#allocation5 + $0x190] sm:$0xff]
    %v222 = vld [vmem:[#allocation5 + $0x198] sm:$0xff]
    %v223 = vld [vmem:[#allocation5 + $0x1a0] sm:$0xff]
    %v224 = vld [vmem:[#allocation5 + $0x1a8] sm:$0xff]
    %v225 = vld [vmem:[#allocation5 + $0x1b0] sm:$0xff]
    %v226 = vld [vmem:[#allocation5 + $0x1b8] sm:$0xff]
    %v227 = vld [vmem:[#allocation5 + $0x1c0] sm:$0xff]
    %v228 = vld [vmem:[#allocation5 + $0x1c8] sm:$0xff]
    %v229 = vld [vmem:[#allocation5 + $0x1d0] sm:$0xff]
    %v230 = vld [vmem:[#allocation5 + $0x1d8] sm:$0xff]
    %v231 = vld [vmem:[#allocation5 + $0x1e0] sm:$0xff]
    %v232 = vld [vmem:[#allocation5 + $0x1e8] sm:$0xff]
    %v233 = vld [vmem:[#allocation5 + $0x1f0] sm:$0xff]
    %v234 = vld [vmem:[#allocation5 + $0x1f8] sm:$0xff]
    %v235 = vld [vmem:[#allocation5 + $0x200] sm:$0xff]
    %v236 = vld [vmem:[#allocation5 + $0x208] sm:$0xff]
    %v237 = vld [vmem:[#allocation5 + $0x210] sm:$0xff]
    %v238 = vld [vmem:[#allocation5 + $0x218] sm:$0xff]
    %v239 = vld [vmem:[#allocation5 + $0x220] sm:$0xff]
    %v240 = vld [vmem:[#allocation5 + $0x228] sm:$0xff]
    %v241 = vld [vmem:[#allocation5 + $0x230] sm:$0xff]
    %v242 = vld [vmem:[#allocation5 + $0x238] sm:$0xff]
    %v243 = vld [vmem:[#allocation5 + $0x240] sm:$0xff]
    %v244 = vld [vmem:[#allocation5 + $0x248] sm:$0xff]
    %v245 = vld [vmem:[#allocation5 + $0x250] sm:$0xff]
    %v246 = vld [vmem:[#allocation5 + $0x258] sm:$0xff]
    %v247 = vld [vmem:[#allocation5 + $0x260] sm:$0xff]
    %v248 = vld [vmem:[#allocation5 + $0x268] sm:$0xff]
    %v249 = vld [vmem:[#allocation5 + $0x270] sm:$0xff]
    %v250 = vld [vmem:[#allocation5 + $0x278] sm:$0xff]
    %v251 = vld [vmem:[#allocation5 + $0x280] sm:$0xff]
    %v252 = vld [vmem:[#allocation5 + $0x288] sm:$0xff]
    %v253 = vld [vmem:[#allocation5 + $0x290] sm:$0xff]
    %v254 = vld [vmem:[#allocation5 + $0x298] sm:$0xff]
    %v255 = vld [vmem:[#allocation5 + $0x2a0] sm:$0xff]
    %v256 = vld [vmem:[#allocation5 + $0x2a8] sm:$0xff]
    %v257 = vld [vmem:[#allocation5 + $0x2b0] sm:$0xff]
    %v258 = vld [vmem:[#allocation5 + $0x2b8] sm:$0xff]
    %v259 = vld [vmem:[#allocation5 + $0x2c0] sm:$0xff]
    %v260 = vld [vmem:[#allocation5 + $0x2c8] sm:$0xff]
    %v261 = vld [vmem:[#allocation5 + $0x2d0] sm:$0xff]
    %v262 = vld [vmem:[#allocation5 + $0x2d8] sm:$0xff]
    %v263 = vld [vmem:[#allocation5 + $0x2e0] sm:$0xff]
    %v264 = vld [vmem:[#allocation5 + $0x2e8] sm:$0xff]
    %v265 = vld [vmem:[#allocation5 + $0x2f0] sm:$0xff]
    %v266 = vld [vmem:[#allocation5 + $0x2f8] sm:$0xff]
    %v267 = vld [vmem:[#allocation5 + $0x300] sm:$0xff]
    %v268 = vld [vmem:[#allocation5 + $0x308] sm:$0xff]
    %v269 = vld [vmem:[#allocation5 + $0x310] sm:$0xff]
    %v270 = vld [vmem:[#allocation5 + $0x318] sm:$0xff]
    %v271 = vld [vmem:[#allocation5 + $0x320] sm:$0xff]
    %v272 = vld [vmem:[#allocation5 + $0x328] sm:$0xff]
    %v273 = vld [vmem:[#allocation5 + $0x330] sm:$0xff]
    %v274 = vld [vmem:[#allocation5 + $0x338] sm:$0xff]
    %v275 = vld [vmem:[#allocation5 + $0x340] sm:$0xff]
    %v276 = vld [vmem:[#allocation5 + $0x348] sm:$0xff]
    %v277 = vld [vmem:[#allocation5 + $0x350] sm:$0xff]
    %v278 = vld [vmem:[#allocation5 + $0x358] sm:$0xff]
    %v279 = vld [vmem:[#allocation5 + $0x360] sm:$0xff]
    %v280 = vld [vmem:[#allocation5 + $0x368] sm:$0xff]
    %v281 = vld [vmem:[#allocation5 + $0x370] sm:$0xff]
    %v282 = vld [vmem:[#allocation5 + $0x378] sm:$0xff]
    %v283 = vld [vmem:[#allocation5 + $0x380] sm:$0xff]
    %v284 = vld [vmem:[#allocation5 + $0x388] sm:$0xff]
    %v285 = vld [vmem:[#allocation5 + $0x390] sm:$0xff]
    %v286 = vld [vmem:[#allocation5 + $0x398] sm:$0xff]
    %v287 = vld [vmem:[#allocation5 + $0x3a0] sm:$0xff]
    %v288 = vld [vmem:[#allocation5 + $0x3a8] sm:$0xff]
    %v289 = vld [vmem:[#allocation5 + $0x3b0] sm:$0xff]
    %v290 = vld [vmem:[#allocation5 + $0x3b8] sm:$0xff]
    %v291 = vld [vmem:[#allocation5 + $0x3c0] sm:$0xff]
    %v292 = vld [vmem:[#allocation5 + $0x3c8] sm:$0xff]
    %v293 = vld [vmem:[#allocation5 + $0x3d0] sm:$0xff]
    %v294 = vld [vmem:[#allocation5 + $0x3d8] sm:$0xff]
    %v295 = vld [vmem:[#allocation5 + $0x3e0] sm:$0xff]
    %v296 = vld [vmem:[#allocation5 + $0x3e8] sm:$0xff]
    %v297 = vld [vmem:[#allocation5 + $0x3f0] sm:$0xff]
    %v298 = vld [vmem:[#allocation5 + $0x3f8] sm:$0xff]
    %v299 = vld [vmem:[#allocation5 + $0x400] sm:$0xff]
    %v300 = vld [vmem:[#allocation5 + $0x408] sm:$0xff]
    %v301 = vld [vmem:[#allocation5 + $0x410] sm:$0xff]
    %v302 = vld [vmem:[#allocation5 + $0x418] sm:$0xff]
    %v303 = vld [vmem:[#allocation5 + $0x420] sm:$0xff]
    %v304 = vld [vmem:[#allocation5 + $0x428] sm:$0xff]
    %v305 = vld [vmem:[#allocation5 + $0x430] sm:$0xff]
    %v306 = vld [vmem:[#allocation5 + $0x438] sm:$0xff]
    %v307 = vld [vmem:[#allocation5 + $0x440] sm:$0xff]
    %v308 = vld [vmem:[#allocation5 + $0x448] sm:$0xff]
    %v309 = vld [vmem:[#allocation5 + $0x450] sm:$0xff]
    %v310 = vld [vmem:[#allocation5 + $0x458] sm:$0xff]
    %v311 = vld [vmem:[#allocation5 + $0x460] sm:$0xff]
    %v312 = vld [vmem:[#allocation5 + $0x468] sm:$0xff]
    %v313 = vld [vmem:[#allocation5 + $0x470] sm:$0xff]
    %v314 = vld [vmem:[#allocation5 + $0x478] sm:$0xff]
    %v315 = vld [vmem:[#allocation5 + $0x480] sm:$0xff]
    %v316 = vld [vmem:[#allocation5 + $0x488] sm:$0xff]
    %v317 = vld [vmem:[#allocation5 + $0x490] sm:$0xff]
    %v318 = vld [vmem:[#allocation5 + $0x498] sm:$0xff]
    %v319 = vld [vmem:[#allocation5 + $0x4a0] sm:$0xff]
    %v320 = vld [vmem:[#allocation5 + $0x4a8] sm:$0xff]
    %v321 = vld [vmem:[#allocation5 + $0x4b0] sm:$0xff]
    %v322 = vld [vmem:[#allocation5 + $0x4b8] sm:$0xff]
    %v323 = vld [vmem:[#allocation5 + $0x4c0] sm:$0xff]
    %v324 = vld [vmem:[#allocation5 + $0x4c8] sm:$0xff]
    %v325 = vld [vmem:[#allocation5 + $0x4d0] sm:$0xff]
    %v326 = vld [vmem:[#allocation5 + $0x4d8] sm:$0xff]
    %v327 = vld [vmem:[#allocation5 + $0x4e0] sm:$0xff]
    %v328 = vld [vmem:[#allocation5 + $0x4e8] sm:$0xff]
    %v329 = vld [vmem:[#allocation5 + $0x4f0] sm:$0xff]
    %v330 = vld [vmem:[#allocation5 + $0x4f8] sm:$0xff]
    %v331 = vld [vmem:[#allocation5 + $0x500] sm:$0xff]
    %v332 = vld [vmem:[#allocation5 + $0x508] sm:$0xff]
    %v333 = vld [vmem:[#allocation5 + $0x510] sm:$0xff]
    %v334 = vld [vmem:[#allocation5 + $0x518] sm:$0xff]
    %v335 = vld [vmem:[#allocation5 + $0x520] sm:$0xff]
    %v336 = vld [vmem:[#allocation5 + $0x528] sm:$0xff]
    %v337 = vld [vmem:[#allocation5 + $0x530] sm:$0xff]
    %v338 = vld [vmem:[#allocation5 + $0x538] sm:$0xff]
    %v339 = vld [vmem:[#allocation5 + $0x540] sm:$0xff]
    %v340 = vld [vmem:[#allocation5 + $0x548] sm:$0xff]
    %v341 = vld [vmem:[#allocation5 + $0x550] sm:$0xff]
    %v342 = vld [vmem:[#allocation5 + $0x558] sm:$0xff]
    %v343 = vld [vmem:[#allocation5 + $0x560] sm:$0xff]
    %v344 = vld [vmem:[#allocation5 + $0x568] sm:$0xff]
    %v345 = vld [vmem:[#allocation5 + $0x570] sm:$0xff]
    %v346 = vld [vmem:[#allocation5 + $0x578] sm:$0xff]
    %v347 = vld [vmem:[#allocation5 + $0x580] sm:$0xff]
    %v348 = vld [vmem:[#allocation5 + $0x588] sm:$0xff]
    %v349 = vld [vmem:[#allocation5 + $0x590] sm:$0xff]
    %v350 = vld [vmem:[#allocation5 + $0x598] sm:$0xff]
    %v351 = vld [vmem:[#allocation5 + $0x5a0] sm:$0xff]
    %v352 = vld [vmem:[#allocation5 + $0x5a8] sm:$0xff]
    %v353 = vld [vmem:[#allocation5 + $0x5b0] sm:$0xff]
    %v354 = vld [vmem:[#allocation5 + $0x5b8] sm:$0xff]
    %v355 = vld [vmem:[#allocation5 + $0x5c0] sm:$0xff]
    %v356 = vld [vmem:[#allocation5 + $0x5c8] sm:$0xff]
    %v357 = vld [vmem:[#allocation5 + $0x5d0] sm:$0xff]
    %v358 = vld [vmem:[#allocation5 + $0x5d8] sm:$0xff]
    %v359 = vld [vmem:[#allocation5 + $0x5e0] sm:$0xff]
    %v360 = vld [vmem:[#allocation5 + $0x5e8] sm:$0xff]
    %v361 = vld [vmem:[#allocation5 + $0x5f0] sm:$0xff]
    %v362 = vld [vmem:[#allocation5 + $0x5f8] sm:$0xff]
    %v363 = vld [vmem:[#allocation5 + $0x600] sm:$0xff]
    %v364 = vld [vmem:[#allocation5 + $0x608] sm:$0xff]
    %v365 = vld [vmem:[#allocation5 + $0x610] sm:$0xff]
    %v366 = vld [vmem:[#allocation5 + $0x618] sm:$0xff]
    %v367 = vld [vmem:[%s2] sm:$0xf]
    %v369 = vlaneseq
    %v370 = vshrl.u32 %v369, 7
    %v371 = vsub.s32 0, %v370
    %v372 = vrot.slane %v367, %v371
    %v373 = vlaneseq
    %v374 = vshrl.u32 %v373, 7
    %v375 = vsub.s32 1, %v374
    %v376 = vrot.slane %v367, %v375
    %v377 = vlaneseq
    %v378 = vshrl.u32 %v377, 7
    %v379 = vsub.s32 2, %v378
    %v380 = vrot.slane %v367, %v379
    %v381 = vlaneseq
    %v382 = vshrl.u32 %v381, 7
    %v383 = vsub.s32 3, %v382
    %v384 = vrot.slane %v367, %v383
    %v585 = vunpack.c.l.b16 %v171
    %v586 = vunpack.c.h.b16 %v171
    %v587 = vunpack.c.l.b16 %v172
    %v588 = vunpack.c.h.b16 %v172
    %v589 = vunpack.c.l.b16 %v173
    %v590 = vunpack.c.h.b16 %v173
    %v591 = vunpack.c.l.b16 %v174
    %v592 = vunpack.c.h.b16 %v174
    %v593 = vunpack.c.l.b16 %v175
    %v594 = vunpack.c.h.b16 %v175
    %v595 = vunpack.c.l.b16 %v176
    %v596 = vunpack.c.h.b16 %v176
    %v597 = vunpack.c.l.b16 %v177
    %v598 = vunpack.c.h.b16 %v177
    %v599 = vunpack.c.l.b16 %v178
    %v600 = vunpack.c.h.b16 %v178
    %v601 = vunpack.c.l.b16 %v179
    %v602 = vunpack.c.h.b16 %v179
    %v603 = vunpack.c.l.b16 %v180
    %v604 = vunpack.c.h.b16 %v180
    %v605 = vunpack.c.l.b16 %v181
    %v606 = vunpack.c.h.b16 %v181
    %v607 = vunpack.c.l.b16 %v182
    %v608 = vunpack.c.h.b16 %v182
    %v609 = vunpack.c.l.b16 %v183
    %v610 = vunpack.c.h.b16 %v183
    %v611 = vunpack.c.l.b16 %v184
    %v612 = vunpack.c.h.b16 %v184
    %v613 = vunpack.c.l.b16 %v185
    %v614 = vunpack.c.h.b16 %v185
    %v615 = vunpack.c.l.b16 %v186
    %v616 = vunpack.c.h.b16 %v186
    %v617 = vunpack.c.l.b16 %v187
    %v618 = vunpack.c.h.b16 %v187
    %v619 = vunpack.c.l.b16 %v188
    %v620 = vunpack.c.h.b16 %v188
    %v621 = vunpack.c.l.b16 %v189
    %v622 = vunpack.c.h.b16 %v189
    %v623 = vunpack.c.l.b16 %v190
    %v624 = vunpack.c.h.b16 %v190
    %v625 = vunpack.c.l.b16 %v191
    %v626 = vunpack.c.h.b16 %v191
    %v627 = vunpack.c.l.b16 %v192
    %v628 = vunpack.c.h.b16 %v192
    %v629 = vunpack.c.l.b16 %v193
    %v630 = vunpack.c.h.b16 %v193
    %v631 = vunpack.c.l.b16 %v194
    %v632 = vunpack.c.h.b16 %v194
    %v633 = vunpack.c.l.b16 %v195
    %v634 = vunpack.c.h.b16 %v195
    %v635 = vunpack.c.l.b16 %v196
    %v636 = vunpack.c.h.b16 %v196
    %v637 = vunpack.c.l.b16 %v197
    %v638 = vunpack.c.h.b16 %v197
    %v639 = vunpack.c.l.b16 %v198
    %v640 = vunpack.c.h.b16 %v198
    %v641 = vunpack.c.l.b16 %v199
    %v642 = vunpack.c.h.b16 %v199
    %v643 = vunpack.c.l.b16 %v200
    %v644 = vunpack.c.h.b16 %v200
    %v645 = vunpack.c.l.b16 %v201
    %v646 = vunpack.c.h.b16 %v201
    %v647 = vunpack.c.l.b16 %v202
    %v648 = vunpack.c.h.b16 %v202
    %v649 = vunpack.c.l.b16 %v203
    %v650 = vunpack.c.h.b16 %v203
    %v651 = vunpack.c.l.b16 %v204
    %v652 = vunpack.c.h.b16 %v204
    %v653 = vunpack.c.l.b16 %v205
    %v654 = vunpack.c.h.b16 %v205
    %v655 = vunpack.c.l.b16 %v206
    %v656 = vunpack.c.h.b16 %v206
    %v657 = vunpack.c.l.b16 %v207
    %v658 = vunpack.c.h.b16 %v207
    %v659 = vunpack.c.l.b16 %v208
    %v660 = vunpack.c.h.b16 %v208
    %v661 = vunpack.c.l.b16 %v209
    %v662 = vunpack.c.h.b16 %v209
    %v663 = vunpack.c.l.b16 %v210
    %v664 = vunpack.c.h.b16 %v210
    %v665 = vunpack.c.l.b16 %v211
    %v666 = vunpack.c.h.b16 %v211
    %v667 = vunpack.c.l.b16 %v212
    %v668 = vunpack.c.h.b16 %v212
    %v669 = vunpack.c.l.b16 %v213
    %v670 = vunpack.c.h.b16 %v213
    %v671 = vunpack.c.l.b16 %v214
    %v672 = vunpack.c.h.b16 %v214
    %v673 = vunpack.c.l.b16 %v215
    %v674 = vunpack.c.h.b16 %v215
    %v675 = vunpack.c.l.b16 %v216
    %v676 = vunpack.c.h.b16 %v216
    %v677 = vunpack.c.l.b16 %v217
    %v678 = vunpack.c.h.b16 %v217
    %v679 = vunpack.c.l.b16 %v218
    %v680 = vunpack.c.h.b16 %v218
    %v681 = vunpack.c.l.b16 %v219
    %v682 = vunpack.c.h.b16 %v219
    %v683 = vunpack.c.l.b16 %v220
    %v684 = vunpack.c.h.b16 %v220
    %v685 = vunpack.c.l.b16 %v221
    %v686 = vunpack.c.h.b16 %v221
    %v687 = vunpack.c.l.b16 %v222
    %v688 = vunpack.c.h.b16 %v222
    %v689 = vunpack.c.l.b16 %v223
    %v690 = vunpack.c.h.b16 %v223
    %v691 = vunpack.c.l.b16 %v224
    %v692 = vunpack.c.h.b16 %v224
    %v693 = vunpack.c.l.b16 %v225
    %v694 = vunpack.c.h.b16 %v225
    %v695 = vunpack.c.l.b16 %v226
    %v696 = vunpack.c.h.b16 %v226
    %v697 = vunpack.c.l.b16 %v227
    %v698 = vunpack.c.h.b16 %v227
    %v699 = vunpack.c.l.b16 %v228
    %v700 = vunpack.c.h.b16 %v228
    %v701 = vunpack.c.l.b16 %v229
    %v702 = vunpack.c.h.b16 %v229
    %v703 = vunpack.c.l.b16 %v230
    %v704 = vunpack.c.h.b16 %v230
    %v705 = vunpack.c.l.b16 %v231
    %v706 = vunpack.c.h.b16 %v231
    %v707 = vunpack.c.l.b16 %v232
    %v708 = vunpack.c.h.b16 %v232
    %v709 = vunpack.c.l.b16 %v233
    %v710 = vunpack.c.h.b16 %v233
    %v711 = vunpack.c.l.b16 %v234
    %v712 = vunpack.c.h.b16 %v234
    %v713 = vunpack.c.l.b16 %v235
    %v714 = vunpack.c.h.b16 %v235
    %v715 = vunpack.c.l.b16 %v236
    %v716 = vunpack.c.h.b16 %v236
    %v717 = vunpack.c.l.b16 %v237
    %v718 = vunpack.c.h.b16 %v237
    %v719 = vunpack.c.l.b16 %v238
    %v720 = vunpack.c.h.b16 %v238
    %v721 = vunpack.c.l.b16 %v239
    %v722 = vunpack.c.h.b16 %v239
    %v723 = vunpack.c.l.b16 %v240
    %v724 = vunpack.c.h.b16 %v240
    %v725 = vunpack.c.l.b16 %v241
    %v726 = vunpack.c.h.b16 %v241
    %v727 = vunpack.c.l.b16 %v242
    %v728 = vunpack.c.h.b16 %v242
    %v729 = vunpack.c.l.b16 %v243
    %v730 = vunpack.c.h.b16 %v243
    %v731 = vunpack.c.l.b16 %v244
    %v732 = vunpack.c.h.b16 %v244
    %v733 = vunpack.c.l.b16 %v245
    %v734 = vunpack.c.h.b16 %v245
    %v735 = vunpack.c.l.b16 %v246
    %v736 = vunpack.c.h.b16 %v246
    %v737 = vunpack.c.l.b16 %v247
    %v738 = vunpack.c.h.b16 %v247
    %v739 = vunpack.c.l.b16 %v248
    %v740 = vunpack.c.h.b16 %v248
    %v741 = vunpack.c.l.b16 %v249
    %v742 = vunpack.c.h.b16 %v249
    %v743 = vunpack.c.l.b16 %v250
    %v744 = vunpack.c.h.b16 %v250
    %v745 = vunpack.c.l.b16 %v251
    %v746 = vunpack.c.h.b16 %v251
    %v747 = vunpack.c.l.b16 %v252
    %v748 = vunpack.c.h.b16 %v252
    %v749 = vunpack.c.l.b16 %v253
    %v750 = vunpack.c.h.b16 %v253
    %v751 = vunpack.c.l.b16 %v254
    %v752 = vunpack.c.h.b16 %v254
    %v753 = vunpack.c.l.b16 %v255
    %v754 = vunpack.c.h.b16 %v255
    %v755 = vunpack.c.l.b16 %v256
    %v756 = vunpack.c.h.b16 %v256
    %v757 = vunpack.c.l.b16 %v257
    %v758 = vunpack.c.h.b16 %v257
    %v759 = vunpack.c.l.b16 %v258
    %v760 = vunpack.c.h.b16 %v258
    %v761 = vunpack.c.l.b16 %v259
    %v762 = vunpack.c.h.b16 %v259
    %v763 = vunpack.c.l.b16 %v260
    %v764 = vunpack.c.h.b16 %v260
    %v765 = vunpack.c.l.b16 %v261
    %v766 = vunpack.c.h.b16 %v261
    %v767 = vunpack.c.l.b16 %v262
    %v768 = vunpack.c.h.b16 %v262
    %v769 = vunpack.c.l.b16 %v263
    %v770 = vunpack.c.h.b16 %v263
    %v771 = vunpack.c.l.b16 %v264
    %v772 = vunpack.c.h.b16 %v264
    %v773 = vunpack.c.l.b16 %v265
    %v774 = vunpack.c.h.b16 %v265
    %v775 = vunpack.c.l.b16 %v266
    %v776 = vunpack.c.h.b16 %v266
    %v777 = vunpack.c.l.b16 %v267
    %v778 = vunpack.c.h.b16 %v267
    %v779 = vunpack.c.l.b16 %v268
    %v780 = vunpack.c.h.b16 %v268
    %v781 = vunpack.c.l.b16 %v269
    %v782 = vunpack.c.h.b16 %v269
    %v783 = vunpack.c.l.b16 %v270
    %v784 = vunpack.c.h.b16 %v270
    %v785 = vunpack.c.l.b16 %v271
    %v786 = vunpack.c.h.b16 %v271
    %v787 = vunpack.c.l.b16 %v272
    %v788 = vunpack.c.h.b16 %v272
    %v789 = vunpack.c.l.b16 %v273
    %v790 = vunpack.c.h.b16 %v273
    %v791 = vunpack.c.l.b16 %v274
    %v792 = vunpack.c.h.b16 %v274
    %v793 = vunpack.c.l.b16 %v275
    %v794 = vunpack.c.h.b16 %v275
    %v795 = vunpack.c.l.b16 %v276
    %v796 = vunpack.c.h.b16 %v276
    %v797 = vunpack.c.l.b16 %v277
    %v798 = vunpack.c.h.b16 %v277
    %v799 = vunpack.c.l.b16 %v278
    %v800 = vunpack.c.h.b16 %v278
    %v801 = vunpack.c.l.b16 %v279
    %v802 = vunpack.c.h.b16 %v279
    %v803 = vunpack.c.l.b16 %v280
    %v804 = vunpack.c.h.b16 %v280
    %v805 = vunpack.c.l.b16 %v281
    %v806 = vunpack.c.h.b16 %v281
    %v807 = vunpack.c.l.b16 %v282
    %v808 = vunpack.c.h.b16 %v282
    %v809 = vunpack.c.l.b16 %v283
    %v810 = vunpack.c.h.b16 %v283
    %v811 = vunpack.c.l.b16 %v284
    %v812 = vunpack.c.h.b16 %v284
    %v813 = vunpack.c.l.b16 %v285
    %v814 = vunpack.c.h.b16 %v285
    %v815 = vunpack.c.l.b16 %v286
    %v816 = vunpack.c.h.b16 %v286
    %v817 = vunpack.c.l.b16 %v287
    %v818 = vunpack.c.h.b16 %v287
    %v819 = vunpack.c.l.b16 %v288
    %v820 = vunpack.c.h.b16 %v288
    %v821 = vunpack.c.l.b16 %v289
    %v822 = vunpack.c.h.b16 %v289
    %v823 = vunpack.c.l.b16 %v290
    %v824 = vunpack.c.h.b16 %v290
    %v825 = vunpack.c.l.b16 %v291
    %v826 = vunpack.c.h.b16 %v291
    %v827 = vunpack.c.l.b16 %v292
    %v828 = vunpack.c.h.b16 %v292
    %v829 = vunpack.c.l.b16 %v293
    %v830 = vunpack.c.h.b16 %v293
    %v831 = vunpack.c.l.b16 %v294
    %v832 = vunpack.c.h.b16 %v294
    %v833 = vunpack.c.l.b16 %v295
    %v834 = vunpack.c.h.b16 %v295
    %v835 = vunpack.c.l.b16 %v296
    %v836 = vunpack.c.h.b16 %v296
    %v837 = vunpack.c.l.b16 %v297
    %v838 = vunpack.c.h.b16 %v297
    %v839 = vunpack.c.l.b16 %v298
    %v840 = vunpack.c.h.b16 %v298
    %v841 = vunpack.c.l.b16 %v299
    %v842 = vunpack.c.h.b16 %v299
    %v843 = vunpack.c.l.b16 %v300
    %v844 = vunpack.c.h.b16 %v300
    %v845 = vunpack.c.l.b16 %v301
    %v846 = vunpack.c.h.b16 %v301
    %v847 = vunpack.c.l.b16 %v302
    %v848 = vunpack.c.h.b16 %v302
    %v849 = vunpack.c.l.b16 %v303
    %v850 = vunpack.c.h.b16 %v303
    %v851 = vunpack.c.l.b16 %v304
    %v852 = vunpack.c.h.b16 %v304
    %v853 = vunpack.c.l.b16 %v305
    %v854 = vunpack.c.h.b16 %v305
    %v855 = vunpack.c.l.b16 %v306
    %v856 = vunpack.c.h.b16 %v306
    %v857 = vunpack.c.l.b16 %v307
    %v858 = vunpack.c.h.b16 %v307
    %v859 = vunpack.c.l.b16 %v308
    %v860 = vunpack.c.h.b16 %v308
    %v861 = vunpack.c.l.b16 %v309
    %v862 = vunpack.c.h.b16 %v309
    %v863 = vunpack.c.l.b16 %v310
    %v864 = vunpack.c.h.b16 %v310
    %v865 = vunpack.c.l.b16 %v311
    %v866 = vunpack.c.h.b16 %v311
    %v867 = vunpack.c.l.b16 %v312
    %v868 = vunpack.c.h.b16 %v312
    %v869 = vunpack.c.l.b16 %v313
    %v870 = vunpack.c.h.b16 %v313
    %v871 = vunpack.c.l.b16 %v314
    %v872 = vunpack.c.h.b16 %v314
    %v873 = vunpack.c.l.b16 %v315
    %v874 = vunpack.c.h.b16 %v315
    %v875 = vunpack.c.l.b16 %v316
    %v876 = vunpack.c.h.b16 %v316
    %v877 = vunpack.c.l.b16 %v317
    %v878 = vunpack.c.h.b16 %v317
    %v879 = vunpack.c.l.b16 %v318
    %v880 = vunpack.c.h.b16 %v318
    %v881 = vunpack.c.l.b16 %v319
    %v882 = vunpack.c.h.b16 %v319
    %v883 = vunpack.c.l.b16 %v320
    %v884 = vunpack.c.h.b16 %v320
    %v885 = vunpack.c.l.b16 %v321
    %v886 = vunpack.c.h.b16 %v321
    %v887 = vunpack.c.l.b16 %v322
    %v888 = vunpack.c.h.b16 %v322
    %v889 = vunpack.c.l.b16 %v323
    %v890 = vunpack.c.h.b16 %v323
    %v891 = vunpack.c.l.b16 %v324
    %v892 = vunpack.c.h.b16 %v324
    %v893 = vunpack.c.l.b16 %v325
    %v894 = vunpack.c.h.b16 %v325
    %v895 = vunpack.c.l.b16 %v326
    %v896 = vunpack.c.h.b16 %v326
    %v897 = vunpack.c.l.b16 %v327
    %v898 = vunpack.c.h.b16 %v327
    %v899 = vunpack.c.l.b16 %v328
    %v900 = vunpack.c.h.b16 %v328
    %v901 = vunpack.c.l.b16 %v329
    %v902 = vunpack.c.h.b16 %v329
    %v903 = vunpack.c.l.b16 %v330
    %v904 = vunpack.c.h.b16 %v330
    %v905 = vunpack.c.l.b16 %v331
    %v906 = vunpack.c.h.b16 %v331
    %v907 = vunpack.c.l.b16 %v332
    %v908 = vunpack.c.h.b16 %v332
    %v909 = vunpack.c.l.b16 %v333
    %v910 = vunpack.c.h.b16 %v333
    %v911 = vunpack.c.l.b16 %v334
    %v912 = vunpack.c.h.b16 %v334
    %v913 = vunpack.c.l.b16 %v335
    %v914 = vunpack.c.h.b16 %v335
    %v915 = vunpack.c.l.b16 %v336
    %v916 = vunpack.c.h.b16 %v336
    %v917 = vunpack.c.l.b16 %v337
    %v918 = vunpack.c.h.b16 %v337
    %v919 = vunpack.c.l.b16 %v338
    %v920 = vunpack.c.h.b16 %v338
    %v921 = vunpack.c.l.b16 %v339
    %v922 = vunpack.c.h.b16 %v339
    %v923 = vunpack.c.l.b16 %v340
    %v924 = vunpack.c.h.b16 %v340
    %v925 = vunpack.c.l.b16 %v341
    %v926 = vunpack.c.h.b16 %v341
    %v927 = vunpack.c.l.b16 %v342
    %v928 = vunpack.c.h.b16 %v342
    %v929 = vunpack.c.l.b16 %v343
    %v930 = vunpack.c.h.b16 %v343
    %v931 = vunpack.c.l.b16 %v344
    %v932 = vunpack.c.h.b16 %v344
    %v933 = vunpack.c.l.b16 %v345
    %v934 = vunpack.c.h.b16 %v345
    %v935 = vunpack.c.l.b16 %v346
    %v936 = vunpack.c.h.b16 %v346
    %v937 = vunpack.c.l.b16 %v347
    %v938 = vunpack.c.h.b16 %v347
    %v939 = vunpack.c.l.b16 %v348
    %v940 = vunpack.c.h.b16 %v348
    %v941 = vunpack.c.l.b16 %v349
    %v942 = vunpack.c.h.b16 %v349
    %v943 = vunpack.c.l.b16 %v350
    %v944 = vunpack.c.h.b16 %v350
    %v945 = vunpack.c.l.b16 %v351
    %v946 = vunpack.c.h.b16 %v351
    %v947 = vunpack.c.l.b16 %v352
    %v948 = vunpack.c.h.b16 %v352
    %v949 = vunpack.c.l.b16 %v353
    %v950 = vunpack.c.h.b16 %v353
    %v951 = vunpack.c.l.b16 %v354
    %v952 = vunpack.c.h.b16 %v354
    %v953 = vunpack.c.l.b16 %v355
    %v954 = vunpack.c.h.b16 %v355
    %v955 = vunpack.c.l.b16 %v356
    %v956 = vunpack.c.h.b16 %v356
    %v957 = vunpack.c.l.b16 %v357
    %v958 = vunpack.c.h.b16 %v357
    %v959 = vunpack.c.l.b16 %v358
    %v960 = vunpack.c.h.b16 %v358
    %v961 = vunpack.c.l.b16 %v359
    %v962 = vunpack.c.h.b16 %v359
    %v963 = vunpack.c.l.b16 %v360
    %v964 = vunpack.c.h.b16 %v360
    %v965 = vunpack.c.l.b16 %v361
    %v966 = vunpack.c.h.b16 %v361
    %v967 = vunpack.c.l.b16 %v362
    %v968 = vunpack.c.h.b16 %v362
    %v969 = vunpack.c.l.b16 %v363
    %v970 = vunpack.c.h.b16 %v363
    %v971 = vunpack.c.l.b16 %v364
    %v972 = vunpack.c.h.b16 %v364
    %v973 = vunpack.c.l.b16 %v365
    %v974 = vunpack.c.h.b16 %v365
    %v975 = vunpack.c.l.b16 %v366
    %v976 = vunpack.c.h.b16 %v366
    %v977 = vpack.c.b16 %v589, %v585
    %v978 = vpack.c.b16 %v590, %v586
    %v979 = vpack.c.b16 %v591, %v587
    %v980 = vpack.c.b16 %v592, %v588
    %v981 = vpack.c.b16 %v597, %v593
    %v982 = vpack.c.b16 %v598, %v594
    %v983 = vpack.c.b16 %v599, %v595
    %v984 = vpack.c.b16 %v600, %v596
    %v985 = vpack.c.b16 %v605, %v601
    %v986 = vpack.c.b16 %v606, %v602
    %v987 = vpack.c.b16 %v607, %v603
    %v988 = vpack.c.b16 %v608, %v604
    %v989 = vpack.c.b16 %v613, %v609
    %v990 = vpack.c.b16 %v614, %v610
    %v991 = vpack.c.b16 %v615, %v611
    %v992 = vpack.c.b16 %v616, %v612
    %v993 = vpack.c.b16 %v621, %v617
    %v994 = vpack.c.b16 %v622, %v618
    %v995 = vpack.c.b16 %v623, %v619
    %v996 = vpack.c.b16 %v624, %v620
    %v997 = vpack.c.b16 %v629, %v625
    %v998 = vpack.c.b16 %v630, %v626
    %v999 = vpack.c.b16 %v631, %v627
    %v1000 = vpack.c.b16 %v632, %v628
    %v1001 = vpack.c.b16 %v637, %v633
    %v1002 = vpack.c.b16 %v638, %v634
    %v1003 = vpack.c.b16 %v639, %v635
    %v1004 = vpack.c.b16 %v640, %v636
    %v1005 = vpack.c.b16 %v645, %v641
    %v1006 = vpack.c.b16 %v646, %v642
    %v1007 = vpack.c.b16 %v647, %v643
    %v1008 = vpack.c.b16 %v648, %v644
    %v1009 = vpack.c.b16 %v653, %v649
    %v1010 = vpack.c.b16 %v654, %v650
    %v1011 = vpack.c.b16 %v655, %v651
    %v1012 = vpack.c.b16 %v656, %v652
    %v1013 = vpack.c.b16 %v661, %v657
    %v1014 = vpack.c.b16 %v662, %v658
    %v1015 = vpack.c.b16 %v663, %v659
    %v1016 = vpack.c.b16 %v664, %v660
    %v1017 = vpack.c.b16 %v669, %v665
    %v1018 = vpack.c.b16 %v670, %v666
    %v1019 = vpack.c.b16 %v671, %v667
    %v1020 = vpack.c.b16 %v672, %v668
    %v1021 = vpack.c.b16 %v677, %v673
    %v1022 = vpack.c.b16 %v678, %v674
    %v1023 = vpack.c.b16 %v679, %v675
    %v1024 = vpack.c.b16 %v680, %v676
    %v1025 = vpack.c.b16 %v685, %v681
    %v1026 = vpack.c.b16 %v686, %v682
    %v1027 = vpack.c.b16 %v687, %v683
    %v1028 = vpack.c.b16 %v688, %v684
    %v1029 = vpack.c.b16 %v693, %v689
    %v1030 = vpack.c.b16 %v694, %v690
    %v1031 = vpack.c.b16 %v695, %v691
    %v1032 = vpack.c.b16 %v696, %v692
    %v1033 = vpack.c.b16 %v701, %v697
    %v1034 = vpack.c.b16 %v702, %v698
    %v1035 = vpack.c.b16 %v703, %v699
    %v1036 = vpack.c.b16 %v704, %v700
    %v1037 = vpack.c.b16 %v709, %v705
    %v1038 = vpack.c.b16 %v710, %v706
    %v1039 = vpack.c.b16 %v711, %v707
    %v1040 = vpack.c.b16 %v712, %v708
    %v1041 = vpack.c.b16 %v717, %v713
    %v1042 = vpack.c.b16 %v718, %v714
    %v1043 = vpack.c.b16 %v719, %v715
    %v1044 = vpack.c.b16 %v720, %v716
    %v1045 = vpack.c.b16 %v725, %v721
    %v1046 = vpack.c.b16 %v726, %v722
    %v1047 = vpack.c.b16 %v727, %v723
    %v1048 = vpack.c.b16 %v728, %v724
    %v1049 = vpack.c.b16 %v733, %v729
    %v1050 = vpack.c.b16 %v734, %v730
    %v1051 = vpack.c.b16 %v735, %v731
    %v1052 = vpack.c.b16 %v736, %v732
    %v1053 = vpack.c.b16 %v741, %v737
    %v1054 = vpack.c.b16 %v742, %v738
    %v1055 = vpack.c.b16 %v743, %v739
    %v1056 = vpack.c.b16 %v744, %v740
    %v1057 = vpack.c.b16 %v749, %v745
    %v1058 = vpack.c.b16 %v750, %v746
    %v1059 = vpack.c.b16 %v751, %v747
    %v1060 = vpack.c.b16 %v752, %v748
    %v1061 = vpack.c.b16 %v757, %v753
    %v1062 = vpack.c.b16 %v758, %v754
    %v1063 = vpack.c.b16 %v759, %v755
    %v1064 = vpack.c.b16 %v760, %v756
    %v1065 = vpack.c.b16 %v765, %v761
    %v1066 = vpack.c.b16 %v766, %v762
    %v1067 = vpack.c.b16 %v767, %v763
    %v1068 = vpack.c.b16 %v768, %v764
    %v1069 = vpack.c.b16 %v773, %v769
    %v1070 = vpack.c.b16 %v774, %v770
    %v1071 = vpack.c.b16 %v775, %v771
    %v1072 = vpack.c.b16 %v776, %v772
    %v1073 = vpack.c.b16 %v781, %v777
    %v1074 = vpack.c.b16 %v782, %v778
    %v1075 = vpack.c.b16 %v783, %v779
    %v1076 = vpack.c.b16 %v784, %v780
    %v1077 = vpack.c.b16 %v789, %v785
    %v1078 = vpack.c.b16 %v790, %v786
    %v1079 = vpack.c.b16 %v791, %v787
    %v1080 = vpack.c.b16 %v792, %v788
    %v1081 = vpack.c.b16 %v797, %v793
    %v1082 = vpack.c.b16 %v798, %v794
    %v1083 = vpack.c.b16 %v799, %v795
    %v1084 = vpack.c.b16 %v800, %v796
    %v1085 = vpack.c.b16 %v805, %v801
    %v1086 = vpack.c.b16 %v806, %v802
    %v1087 = vpack.c.b16 %v807, %v803
    %v1088 = vpack.c.b16 %v808, %v804
    %v1089 = vpack.c.b16 %v813, %v809
    %v1090 = vpack.c.b16 %v814, %v810
    %v1091 = vpack.c.b16 %v815, %v811
    %v1092 = vpack.c.b16 %v816, %v812
    %v1093 = vpack.c.b16 %v821, %v817
    %v1094 = vpack.c.b16 %v822, %v818
    %v1095 = vpack.c.b16 %v823, %v819
    %v1096 = vpack.c.b16 %v824, %v820
    %v1097 = vpack.c.b16 %v829, %v825
    %v1098 = vpack.c.b16 %v830, %v826
    %v1099 = vpack.c.b16 %v831, %v827
    %v1100 = vpack.c.b16 %v832, %v828
    %v1101 = vpack.c.b16 %v837, %v833
    %v1102 = vpack.c.b16 %v838, %v834
    %v1103 = vpack.c.b16 %v839, %v835
    %v1104 = vpack.c.b16 %v840, %v836
    %v1105 = vpack.c.b16 %v845, %v841
    %v1106 = vpack.c.b16 %v846, %v842
    %v1107 = vpack.c.b16 %v847, %v843
    %v1108 = vpack.c.b16 %v848, %v844
    %v1109 = vpack.c.b16 %v853, %v849
    %v1110 = vpack.c.b16 %v854, %v850
    %v1111 = vpack.c.b16 %v855, %v851
    %v1112 = vpack.c.b16 %v856, %v852
    %v1113 = vpack.c.b16 %v861, %v857
    %v1114 = vpack.c.b16 %v862, %v858
    %v1115 = vpack.c.b16 %v863, %v859
    %v1116 = vpack.c.b16 %v864, %v860
    %v1117 = vpack.c.b16 %v869, %v865
    %v1118 = vpack.c.b16 %v870, %v866
    %v1119 = vpack.c.b16 %v871, %v867
    %v1120 = vpack.c.b16 %v872, %v868
    %v1121 = vpack.c.b16 %v877, %v873
    %v1122 = vpack.c.b16 %v878, %v874
    %v1123 = vpack.c.b16 %v879, %v875
    %v1124 = vpack.c.b16 %v880, %v876
    %v1125 = vpack.c.b16 %v885, %v881
    %v1126 = vpack.c.b16 %v886, %v882
    %v1127 = vpack.c.b16 %v887, %v883
    %v1128 = vpack.c.b16 %v888, %v884
    %v1129 = vpack.c.b16 %v893, %v889
    %v1130 = vpack.c.b16 %v894, %v890
    %v1131 = vpack.c.b16 %v895, %v891
    %v1132 = vpack.c.b16 %v896, %v892
    %v1133 = vpack.c.b16 %v901, %v897
    %v1134 = vpack.c.b16 %v902, %v898
    %v1135 = vpack.c.b16 %v903, %v899
    %v1136 = vpack.c.b16 %v904, %v900
    %v1137 = vpack.c.b16 %v909, %v905
    %v1138 = vpack.c.b16 %v910, %v906
    %v1139 = vpack.c.b16 %v911, %v907
    %v1140 = vpack.c.b16 %v912, %v908
    %v1141 = vpack.c.b16 %v917, %v913
    %v1142 = vpack.c.b16 %v918, %v914
    %v1143 = vpack.c.b16 %v919, %v915
    %v1144 = vpack.c.b16 %v920, %v916
    %v1145 = vpack.c.b16 %v925, %v921
    %v1146 = vpack.c.b16 %v926, %v922
    %v1147 = vpack.c.b16 %v927, %v923
    %v1148 = vpack.c.b16 %v928, %v924
    %v1149 = vpack.c.b16 %v933, %v929
    %v1150 = vpack.c.b16 %v934, %v930
    %v1151 = vpack.c.b16 %v935, %v931
    %v1152 = vpack.c.b16 %v936, %v932
    %v1153 = vpack.c.b16 %v941, %v937
    %v1154 = vpack.c.b16 %v942, %v938
    %v1155 = vpack.c.b16 %v943, %v939
    %v1156 = vpack.c.b16 %v944, %v940
    %v1157 = vpack.c.b16 %v949, %v945
    %v1158 = vpack.c.b16 %v950, %v946
    %v1159 = vpack.c.b16 %v951, %v947
    %v1160 = vpack.c.b16 %v952, %v948
    %v1161 = vpack.c.b16 %v957, %v953
    %v1162 = vpack.c.b16 %v958, %v954
    %v1163 = vpack.c.b16 %v959, %v955
    %v1164 = vpack.c.b16 %v960, %v956
    %v1165 = vpack.c.b16 %v965, %v961
    %v1166 = vpack.c.b16 %v966, %v962
    %v1167 = vpack.c.b16 %v967, %v963
    %v1168 = vpack.c.b16 %v968, %v964
    %v1169 = vpack.c.b16 %v973, %v969
    %v1170 = vpack.c.b16 %v974, %v970
    %v1171 = vpack.c.b16 %v975, %v971
    %v1172 = vpack.c.b16 %v976, %v972
    %vm1369 = vcmask 130048
    %v1371 = vsel %vm1369, %v170, 0
    %1373 = vmatprep.subr.bf16.mxu0 %v978
    %1374 = vmatpush1.bf16.msra.mxu0 %v977
    %1375 = vmatprep.subr.bf16.mxu0 %v982
    %1376 = vmatpush1.bf16.msra.mxu0 %v981
    %1377 = vmatprep.subr.bf16.mxu0 %v986
    %1378 = vmatpush1.bf16.msra.mxu0 %v985
    %1379 = vmatprep.subr.bf16.mxu0 %v990
    %1380 = vmatpush1.bf16.msra.mxu0 %v989
    %1381 = vmatprep.subr.bf16.mxu0 %v994
    %1382 = vmatpush1.bf16.msra.mxu0 %v993
    %1383 = vmatprep.subr.bf16.mxu0 %v998
    %1384 = vmatpush1.bf16.msra.mxu0 %v997
    %1385 = vmatprep.subr.bf16.mxu0 %v1002
    %1386 = vmatpush1.bf16.msra.mxu0 %v1001
    %1387 = vmatprep.subr.bf16.mxu0 %v1006
    %1388 = vmatpush1.bf16.msra.mxu0 %v1005
    %1389 = vmatprep.subr.bf16.mxu0 %v1010
    %1390 = vmatpush1.bf16.msra.mxu0 %v1009
    %1391 = vmatprep.subr.bf16.mxu0 %v1014
    %1392 = vmatpush1.bf16.msra.mxu0 %v1013
    %1393 = vmatprep.subr.bf16.mxu0 %v1018
    %1394 = vmatpush1.bf16.msra.mxu0 %v1017
    %1395 = vmatprep.subr.bf16.mxu0 %v1022
    %1396 = vmatpush1.bf16.msra.mxu0 %v1021
    %1397 = vmatprep.subr.bf16.mxu0 %v1026
    %1398 = vmatpush1.bf16.msra.mxu0 %v1025
    %1399 = vmatprep.subr.bf16.mxu0 %v1030
    %1400 = vmatpush1.bf16.msra.mxu0 %v1029
    %1401 = vmatprep.subr.bf16.mxu0 %v1034
    %1402 = vmatpush1.bf16.msra.mxu0 %v1033
    %1403 = vmatprep.subr.bf16.mxu0 %v1038
    %1404 = vmatpush1.bf16.msra.mxu0 %v1037
    %1405 = vmatprep.mubr.bf16.mxu0 %v165
    %1406 = vmatmul.mubr.bf16.gmra.mrb[0].mxu0 %v164
    %v1407 = vpop.f32.mrb[0].mxu0
    %v1408 = vadd.f32 %v372, %v1407
    %v1409 = vpop.f32.mrb[0].mxu0
    %v1410 = vadd.f32 %v376, %v1409
    %v1411 = vpop.f32.mrb[0].mxu0
    %v1412 = vpop.f32.mrb[0].mxu0
    %1413 = vdwg.mxu0
    %1414 = vmatprep.subr.bf16.mxu0 %v1042
    %1415 = vmatpush1.bf16.msra.mxu0 %v1041
    %1416 = vmatprep.subr.bf16.mxu0 %v1046
    %1417 = vmatpush1.bf16.msra.mxu0 %v1045
    %1418 = vmatprep.subr.bf16.mxu0 %v1050
    %1419 = vmatpush1.bf16.msra.mxu0 %v1049
    %1420 = vmatprep.subr.bf16.mxu0 %v1054
    %1421 = vmatpush1.bf16.msra.mxu0 %v1053
    %1422 = vmatprep.subr.bf16.mxu0 %v1058
    %1423 = vmatpush1.bf16.msra.mxu0 %v1057
    %1424 = vmatprep.subr.bf16.mxu0 %v1062
    %1425 = vmatpush1.bf16.msra.mxu0 %v1061
    %1426 = vmatprep.subr.bf16.mxu0 %v1066
    %1427 = vmatpush1.bf16.msra.mxu0 %v1065
    %1428 = vmatprep.subr.bf16.mxu0 %v1070
    %1429 = vmatpush1.bf16.msra.mxu0 %v1069
    %1430 = vmatprep.subr.bf16.mxu0 %v1074
    %1431 = vmatpush1.bf16.msra.mxu0 %v1073
    %1432 = vmatprep.subr.bf16.mxu0 %v1078
    %1433 = vmatpush1.bf16.msra.mxu0 %v1077
    %1434 = vmatprep.subr.bf16.mxu0 %v1082
    %1435 = vmatpush1.bf16.msra.mxu0 %v1081
    %1436 = vmatprep.subr.bf16.mxu0 %v1086
    %1437 = vmatpush1.bf16.msra.mxu0 %v1085
    %1438 = vmatprep.subr.bf16.mxu0 %v1090
    %1439 = vmatpush1.bf16.msra.mxu0 %v1089
    %1440 = vmatprep.subr.bf16.mxu0 %v1094
    %1441 = vmatpush1.bf16.msra.mxu0 %v1093
    %1442 = vmatprep.subr.bf16.mxu0 %v1098
    %1443 = vmatpush1.bf16.msra.mxu0 %v1097
    %1444 = vmatprep.subr.bf16.mxu0 %v1102
    %1445 = vmatpush1.bf16.msra.mxu0 %v1101
    %1446 = vmatprep.mubr.bf16.mxu0 %v167
    %1447 = vmatmul.mubr.bf16.gmra.mrb[0].mxu0 %v166
    %v1448 = vpop.f32.mrb[0].mxu0
    %v1449 = vadd.f32 %v1408, %v1448
    %v1450 = vpop.f32.mrb[0].mxu0
    %v1451 = vadd.f32 %v1410, %v1450
    %v1452 = vpop.f32.mrb[0].mxu0
    %v1453 = vpop.f32.mrb[0].mxu0
    %1454 = vdwg.mxu0
    %1455 = vmatprep.subr.bf16.mxu0 %v1106
    %1456 = vmatpush1.bf16.msra.mxu0 %v1105
    %1457 = vmatprep.subr.bf16.mxu0 %v1110
    %1458 = vmatpush1.bf16.msra.mxu0 %v1109
    %1459 = vmatprep.subr.bf16.mxu0 %v1114
    %1460 = vmatpush1.bf16.msra.mxu0 %v1113
    %1461 = vmatprep.subr.bf16.mxu0 %v1118
    %1462 = vmatpush1.bf16.msra.mxu0 %v1117
    %1463 = vmatprep.subr.bf16.mxu0 %v1122
    %1464 = vmatpush1.bf16.msra.mxu0 %v1121
    %1465 = vmatprep.subr.bf16.mxu0 %v1126
    %1466 = vmatpush1.bf16.msra.mxu0 %v1125
    %1467 = vmatprep.subr.bf16.mxu0 %v1130
    %1468 = vmatpush1.bf16.msra.mxu0 %v1129
    %1469 = vmatprep.subr.bf16.mxu0 %v1134
    %1470 = vmatpush1.bf16.msra.mxu0 %v1133
    %1471 = vmatprep.subr.bf16.mxu0 %v1138
    %1472 = vmatpush1.bf16.msra.mxu0 %v1137
    %1473 = vmatprep.subr.bf16.mxu0 %v1142
    %1474 = vmatpush1.bf16.msra.mxu0 %v1141
    %1475 = vmatprep.subr.bf16.mxu0 %v1146
    %1476 = vmatpush1.bf16.msra.mxu0 %v1145
    %1477 = vmatprep.subr.bf16.mxu0 %v1150
    %1478 = vmatpush1.bf16.msra.mxu0 %v1149
    %1479 = vmatprep.subr.bf16.mxu0 %v1154
    %1480 = vmatpush1.bf16.msra.mxu0 %v1153
    %1481 = vmatprep.subr.bf16.mxu0 %v1158
    %1482 = vmatpush1.bf16.msra.mxu0 %v1157
    %1483 = vmatprep.subr.bf16.mxu0 %v1162
    %1484 = vmatpush1.bf16.msra.mxu0 %v1161
    %1485 = vmatprep.subr.bf16.mxu0 %v1166
    %1486 = vmatpush1.bf16.msra.mxu0 %v1165
    %1487 = vmatprep.mubr.bf16.mxu0 %v169
    %1488 = vmatmul.mubr.bf16.gmra.mrb[0].mxu0 %v168
    %v1489 = vpop.f32.mrb[0].mxu0
    %v1490 = vadd.f32 %v1449, %v1489
    %v1491 = vpop.f32.mrb[0].mxu0
    %v1492 = vadd.f32 %v1451, %v1491
    %v1493 = vpop.f32.mrb[0].mxu0
    %v1494 = vpop.f32.mrb[0].mxu0
    %1495 = vdwg.mxu0
    %1496 = vmatprep.subr.bf16.mxu0 %v1170
    %1497 = vmatpush1.bf16.msra.mxu0 %v1169
    %1498 = vmatprep.subr.bf16.mxu0 0
    %1499 = vmatpush1.bf16.msra.mxu0 0
    %1500 = vmatprep.subr.bf16.mxu0 0
    %1501 = vmatpush1.bf16.msra.mxu0 0
    %1502 = vmatprep.subr.bf16.mxu0 0
    %1503 = vmatpush1.bf16.msra.mxu0 0
    %1504 = vmatprep.subr.bf16.mxu0 0
    %1505 = vmatpush1.bf16.msra.mxu0 0
    %1506 = vmatprep.subr.bf16.mxu0 0
    %1507 = vmatpush1.bf16.msra.mxu0 0
    %1508 = vmatprep.subr.bf16.mxu0 0
    %1509 = vmatpush1.bf16.msra.mxu0 0
    %1510 = vmatprep.subr.bf16.mxu0 0
    %1511 = vmatpush1.bf16.msra.mxu0 0
    %1512 = vmatprep.subr.bf16.mxu0 0
    %1513 = vmatpush1.bf16.msra.mxu0 0
    %1514 = vmatprep.subr.bf16.mxu0 0
    %1515 = vmatpush1.bf16.msra.mxu0 0
    %1516 = vmatprep.subr.bf16.mxu0 0
    %1517 = vmatpush1.bf16.msra.mxu0 0
    %1518 = vmatprep.subr.bf16.mxu0 0
    %1519 = vmatpush1.bf16.msra.mxu0 0
    %1520 = vmatprep.subr.bf16.mxu0 0
    %1521 = vmatpush1.bf16.msra.mxu0 0
    %1522 = vmatprep.subr.bf16.mxu0 0
    %1523 = vmatpush1.bf16.msra.mxu0 0
    %1524 = vmatprep.subr.bf16.mxu0 0
    %1525 = vmatpush1.bf16.msra.mxu0 0
    %1526 = vmatprep.subr.bf16.mxu0 0
    %1527 = vmatpush1.bf16.msra.mxu0 0
    %1528 = vmatprep.mubr.bf16.mxu0 0
    %1529 = vmatmul.mubr.bf16.gmra.mrb[0].mxu0 %v1371
    %v1530 = vpop.f32.mrb[0].mxu0
    %v1531 = vadd.f32 %v1490, %v1530
    %v1532 = vpop.f32.mrb[0].mxu0
    %v1533 = vadd.f32 %v1492, %v1532
    %v1534 = vpop.f32.mrb[0].mxu0
    %v1535 = vpop.f32.mrb[0].mxu0
    %1536 = vdwg.mxu0
    %1537 = vmatprep.subr.bf16.mxu0 %v980
    %1538 = vmatpush1.bf16.msra.mxu0 %v979
    %1539 = vmatprep.subr.bf16.mxu0 %v984
    %1540 = vmatpush1.bf16.msra.mxu0 %v983
    %1541 = vmatprep.subr.bf16.mxu0 %v988
    %1542 = vmatpush1.bf16.msra.mxu0 %v987
    %1543 = vmatprep.subr.bf16.mxu0 %v992
    %1544 = vmatpush1.bf16.msra.mxu0 %v991
    %1545 = vmatprep.subr.bf16.mxu0 %v996
    %1546 = vmatpush1.bf16.msra.mxu0 %v995
    %1547 = vmatprep.subr.bf16.mxu0 %v1000
    %1548 = vmatpush1.bf16.msra.mxu0 %v999
    %1549 = vmatprep.subr.bf16.mxu0 %v1004
    %1550 = vmatpush1.bf16.msra.mxu0 %v1003
    %1551 = vmatprep.subr.bf16.mxu0 %v1008
    %1552 = vmatpush1.bf16.msra.mxu0 %v1007
    %1553 = vmatprep.subr.bf16.mxu0 %v1012
    %1554 = vmatpush1.bf16.msra.mxu0 %v1011
    %1555 = vmatprep.subr.bf16.mxu0 %v1016
    %1556 = vmatpush1.bf16.msra.mxu0 %v1015
    %1557 = vmatprep.subr.bf16.mxu0 %v1020
    %1558 = vmatpush1.bf16.msra.mxu0 %v1019
    %1559 = vmatprep.subr.bf16.mxu0 %v1024
    %1560 = vmatpush1.bf16.msra.mxu0 %v1023
    %1561 = vmatprep.subr.bf16.mxu0 %v1028
    %1562 = vmatpush1.bf16.msra.mxu0 %v1027
    %1563 = vmatprep.subr.bf16.mxu0 %v1032
    %1564 = vmatpush1.bf16.msra.mxu0 %v1031
    %1565 = vmatprep.subr.bf16.mxu0 %v1036
    %1566 = vmatpush1.bf16.msra.mxu0 %v1035
    %1567 = vmatprep.subr.bf16.mxu0 %v1040
    %1568 = vmatpush1.bf16.msra.mxu0 %v1039
    %1569 = vmatprep.mubr.bf16.mxu0 %v165
    %1570 = vmatmul.mubr.bf16.gmra.mrb[0].mxu0 %v164
    %v1571 = vpop.f32.mrb[0].mxu0
    %v1572 = vadd.f32 %v380, %v1571
    %v1573 = vpop.f32.mrb[0].mxu0
    %v1574 = vadd.f32 %v384, %v1573
    %v1575 = vpop.f32.mrb[0].mxu0
    %v1576 = vpop.f32.mrb[0].mxu0
    %1577 = vdwg.mxu0
    %1578 = vmatprep.subr.bf16.mxu0 %v1044
    %1579 = vmatpush1.bf16.msra.mxu0 %v1043
    %1580 = vmatprep.subr.bf16.mxu0 %v1048
    %1581 = vmatpush1.bf16.msra.mxu0 %v1047
    %1582 = vmatprep.subr.bf16.mxu0 %v1052
    %1583 = vmatpush1.bf16.msra.mxu0 %v1051
    %1584 = vmatprep.subr.bf16.mxu0 %v1056
    %1585 = vmatpush1.bf16.msra.mxu0 %v1055
    %1586 = vmatprep.subr.bf16.mxu0 %v1060
    %1587 = vmatpush1.bf16.msra.mxu0 %v1059
    %1588 = vmatprep.subr.bf16.mxu0 %v1064
    %1589 = vmatpush1.bf16.msra.mxu0 %v1063
    %1590 = vmatprep.subr.bf16.mxu0 %v1068
    %1591 = vmatpush1.bf16.msra.mxu0 %v1067
    %1592 = vmatprep.subr.bf16.mxu0 %v1072
    %1593 = vmatpush1.bf16.msra.mxu0 %v1071
    %1594 = vmatprep.subr.bf16.mxu0 %v1076
    %1595 = vmatpush1.bf16.msra.mxu0 %v1075
    %1596 = vmatprep.subr.bf16.mxu0 %v1080
    %1597 = vmatpush1.bf16.msra.mxu0 %v1079
    %1598 = vmatprep.subr.bf16.mxu0 %v1084
    %1599 = vmatpush1.bf16.msra.mxu0 %v1083
    %1600 = vmatprep.subr.bf16.mxu0 %v1088
    %1601 = vmatpush1.bf16.msra.mxu0 %v1087
    %1602 = vmatprep.subr.bf16.mxu0 %v1092
    %1603 = vmatpush1.bf16.msra.mxu0 %v1091
    %1604 = vmatprep.subr.bf16.mxu0 %v1096
    %1605 = vmatpush1.bf16.msra.mxu0 %v1095
    %1606 = vmatprep.subr.bf16.mxu0 %v1100
    %1607 = vmatpush1.bf16.msra.mxu0 %v1099
    %1608 = vmatprep.subr.bf16.mxu0 %v1104
    %1609 = vmatpush1.bf16.msra.mxu0 %v1103
    %1610 = vmatprep.mubr.bf16.mxu0 %v167
    %1611 = vmatmul.mubr.bf16.gmra.mrb[0].mxu0 %v166
    %v1612 = vpop.f32.mrb[0].mxu0
    %v1613 = vadd.f32 %v1572, %v1612
    %v1614 = vpop.f32.mrb[0].mxu0
    %v1615 = vadd.f32 %v1574, %v1614
    %v1616 = vpop.f32.mrb[0].mxu0
    %v1617 = vpop.f32.mrb[0].mxu0
    %1618 = vdwg.mxu0
    %1619 = vmatprep.subr.bf16.mxu0 %v1108
    %1620 = vmatpush1.bf16.msra.mxu0 %v1107
    %1621 = vmatprep.subr.bf16.mxu0 %v1112
    %1622 = vmatpush1.bf16.msra.mxu0 %v1111
    %1623 = vmatprep.subr.bf16.mxu0 %v1116
    %1624 = vmatpush1.bf16.msra.mxu0 %v1115
    %1625 = vmatprep.subr.bf16.mxu0 %v1120
    %1626 = vmatpush1.bf16.msra.mxu0 %v1119
    %1627 = vmatprep.subr.bf16.mxu0 %v1124
    %1628 = vmatpush1.bf16.msra.mxu0 %v1123
    %1629 = vmatprep.subr.bf16.mxu0 %v1128
    %1630 = vmatpush1.bf16.msra.mxu0 %v1127
    %1631 = vmatprep.subr.bf16.mxu0 %v1132
    %1632 = vmatpush1.bf16.msra.mxu0 %v1131
    %1633 = vmatprep.subr.bf16.mxu0 %v1136
    %1634 = vmatpush1.bf16.msra.mxu0 %v1135
    %1635 = vmatprep.subr.bf16.mxu0 %v1140
    %1636 = vmatpush1.bf16.msra.mxu0 %v1139
    %1637 = vmatprep.subr.bf16.mxu0 %v1144
    %1638 = vmatpush1.bf16.msra.mxu0 %v1143
    %1639 = vmatprep.subr.bf16.mxu0 %v1148
    %1640 = vmatpush1.bf16.msra.mxu0 %v1147
    %1641 = vmatprep.subr.bf16.mxu0 %v1152
    %1642 = vmatpush1.bf16.msra.mxu0 %v1151
    %1643 = vmatprep.subr.bf16.mxu0 %v1156
    %1644 = vmatpush1.bf16.msra.mxu0 %v1155
    %1645 = vmatprep.subr.bf16.mxu0 %v1160
    %1646 = vmatpush1.bf16.msra.mxu0 %v1159
    %1647 = vmatprep.subr.bf16.mxu0 %v1164
    %1648 = vmatpush1.bf16.msra.mxu0 %v1163
    %1649 = vmatprep.subr.bf16.mxu0 %v1168
    %1650 = vmatpush1.bf16.msra.mxu0 %v1167
    %1651 = vmatprep.mubr.bf16.mxu0 %v169
    %1652 = vmatmul.mubr.bf16.gmra.mrb[0].mxu0 %v168
    %v1653 = vpop.f32.mrb[0].mxu0
    %v1654 = vadd.f32 %v1613, %v1653
    %v1655 = vpop.f32.mrb[0].mxu0
    %v1656 = vadd.f32 %v1615, %v1655
    %v1657 = vpop.f32.mrb[0].mxu0
    %v1658 = vpop.f32.mrb[0].mxu0
    %1659 = vdwg.mxu0
    %1660 = vmatprep.subr.bf16.mxu0 %v1172
    %1661 = vmatpush1.bf16.msra.mxu0 %v1171
    %1662 = vmatprep.subr.bf16.mxu0 0
    %1663 = vmatpush1.bf16.msra.mxu0 0
    %1664 = vmatprep.subr.bf16.mxu0 0
    %1665 = vmatpush1.bf16.msra.mxu0 0
    %1666 = vmatprep.subr.bf16.mxu0 0
    %1667 = vmatpush1.bf16.msra.mxu0 0
    %1668 = vmatprep.subr.bf16.mxu0 0
    %1669 = vmatpush1.bf16.msra.mxu0 0
    %1670 = vmatprep.subr.bf16.mxu0 0
    %1671 = vmatpush1.bf16.msra.mxu0 0
    %1672 = vmatprep.subr.bf16.mxu0 0
    %1673 = vmatpush1.bf16.msra.mxu0 0
    %1674 = vmatprep.subr.bf16.mxu0 0
    %1675 = vmatpush1.bf16.msra.mxu0 0
    %1676 = vmatprep.subr.bf16.mxu0 0
    %1677 = vmatpush1.bf16.msra.mxu0 0
    %1678 = vmatprep.subr.bf16.mxu0 0
    %1679 = vmatpush1.bf16.msra.mxu0 0
    %1680 = vmatprep.subr.bf16.mxu0 0
    %1681 = vmatpush1.bf16.msra.mxu0 0
    %1682 = vmatprep.subr.bf16.mxu0 0
    %1683 = vmatpush1.bf16.msra.mxu0 0
    %1684 = vmatprep.subr.bf16.mxu0 0
    %1685 = vmatpush1.bf16.msra.mxu0 0
    %1686 = vmatprep.subr.bf16.mxu0 0
    %1687 = vmatpush1.bf16.msra.mxu0 0
    %1688 = vmatprep.subr.bf16.mxu0 0
    %1689 = vmatpush1.bf16.msra.mxu0 0
    %1690 = vmatprep.subr.bf16.mxu0 0
    %1691 = vmatpush1.bf16.msra.mxu0 0
    %1692 = vmatprep.mubr.bf16.mxu0 0
    %1693 = vmatmul.mubr.bf16.gmra.mrb[0].mxu0 %v1371
    %v1694 = vpop.f32.mrb[0].mxu0
    %v1695 = vadd.f32 %v1654, %v1694
    %v1696 = vpop.f32.mrb[0].mxu0
    %v1697 = vadd.f32 %v1656, %v1696
    %v1698 = vpop.f32.mrb[0].mxu0
    %v1699 = vpop.f32.mrb[0].mxu0
    %1700 = vdwg.mxu0
    %v1701 = vmax.f32 %v1531, 0.0
    %v1702 = vmax.f32 %v1533, 0.0
    %v1703 = vmax.f32 %v1695, 0.0
    %v1704 = vmax.f32 %v1697, 0.0
    %v1705 = vpack.c.bf16 %v1701, %v1701
    %v1706 = vpack.c.bf16 %v1702, %v1702
    %v1707 = vpack.c.bf16 %v1703, %v1703
    %v1708 = vpack.c.bf16 %v1704, %v1704
    %v1709 = vld [vmem:[#allocation7] sm:$0xff]
    %v1710 = vld [vmem:[#allocation7 + $0x8] sm:$0xff]
    %v1711 = vld [vmem:[#allocation7 + $0x10] sm:$0xff]
    %v1712 = vld [vmem:[#allocation7 + $0x18] sm:$0xff]
    %v1713 = vld [vmem:[#allocation7 + $0x20] sm:$0xff]
    %v1714 = vld [vmem:[#allocation7 + $0x28] sm:$0xff]
    %v1715 = vld [vmem:[#allocation7 + $0x30] sm:$0xff]
    %v1716 = vld [vmem:[#allocation7 + $0x38] sm:$0xff]
    %v1717 = vld [vmem:[#allocation7 + $0x40] sm:$0xff]
    %v1718 = vld [vmem:[#allocation7 + $0x48] sm:$0xff]
    %v1719 = vld [vmem:[#allocation7 + $0x50] sm:$0xff]
    %v1720 = vld [vmem:[#allocation7 + $0x58] sm:$0xff]
    %v1721 = vld [vmem:[#allocation7 + $0x60] sm:$0xff]
    %v1722 = vld [vmem:[#allocation7 + $0x68] sm:$0xff]
    %v1723 = vld [vmem:[#allocation7 + $0x70] sm:$0xff]
    %v1724 = vld [vmem:[#allocation7 + $0x78] sm:$0xff]
    %v1725 = vld [vmem:[#allocation7 + $0x80] sm:$0xff]
    %v1726 = vld [vmem:[#allocation7 + $0x88] sm:$0xff]
    %v1727 = vld [vmem:[#allocation7 + $0x90] sm:$0xff]
    %v1728 = vld [vmem:[#allocation7 + $0x98] sm:$0xff]
    %v1729 = vld [vmem:[#allocation7 + $0xa0] sm:$0xff]
    %v1730 = vld [vmem:[#allocation7 + $0xa8] sm:$0xff]
    %v1731 = vld [vmem:[#allocation7 + $0xb0] sm:$0xff]
    %v1732 = vld [vmem:[#allocation7 + $0xb8] sm:$0xff]
    %v1733 = vld [vmem:[#allocation7 + $0xc0] sm:$0xff]
    %v1734 = vld [vmem:[#allocation7 + $0xc8] sm:$0xff]
    %v1735 = vld [vmem:[#allocation7 + $0xd0] sm:$0xff]
    %v1736 = vld [vmem:[#allocation7 + $0xd8] sm:$0xff]
    %v1737 = vld [vmem:[#allocation7 + $0xe0] sm:$0xff]
    %v1738 = vld [vmem:[#allocation7 + $0xe8] sm:$0xff]
    %v1739 = vld [vmem:[#allocation7 + $0xf0] sm:$0xff]
    %v1740 = vld [vmem:[#allocation7 + $0xf8] sm:$0xff]
    %v1741 = vld [vmem:[#allocation7 + $0x100] sm:$0xff]
    %v1742 = vld [vmem:[#allocation7 + $0x108] sm:$0xff]
    %v1743 = vld [vmem:[#allocation7 + $0x110] sm:$0xff]
    %v1744 = vld [vmem:[#allocation7 + $0x118] sm:$0xff]
    %v1745 = vld [vmem:[#allocation7 + $0x120] sm:$0xff]
    %v1746 = vld [vmem:[#allocation7 + $0x128] sm:$0xff]
    %v1747 = vld [vmem:[#allocation7 + $0x130] sm:$0xff]
    %v1748 = vld [vmem:[#allocation7 + $0x138] sm:$0xff]
    %v1749 = vld [vmem:[#allocation7 + $0x140] sm:$0xff]
    %v1750 = vld [vmem:[#allocation7 + $0x148] sm:$0xff]
    %v1751 = vld [vmem:[#allocation7 + $0x150] sm:$0xff]
    %v1752 = vld [vmem:[#allocation7 + $0x158] sm:$0xff]
    %v1753 = vld [vmem:[#allocation7 + $0x160] sm:$0xff]
    %v1754 = vld [vmem:[#allocation7 + $0x168] sm:$0xff]
    %v1755 = vld [vmem:[#allocation7 + $0x170] sm:$0xff]
    %v1756 = vld [vmem:[#allocation7 + $0x178] sm:$0xff]
    %v1757 = vld [vmem:[#allocation7 + $0x180] sm:$0xff]
    %v1758 = vld [vmem:[#allocation7 + $0x188] sm:$0xff]
    %v1759 = vld [vmem:[#allocation7 + $0x190] sm:$0xff]
    %v1760 = vld [vmem:[#allocation7 + $0x198] sm:$0xff]
    %v1761 = vld [vmem:[#allocation7 + $0x1a0] sm:$0xff]
    %v1762 = vld [vmem:[#allocation7 + $0x1a8] sm:$0xff]
    %v1763 = vld [vmem:[#allocation7 + $0x1b0] sm:$0xff]
    %v1764 = vld [vmem:[#allocation7 + $0x1b8] sm:$0xff]
    %v1765 = vld [vmem:[#allocation7 + $0x1c0] sm:$0xff]
    %v1766 = vld [vmem:[#allocation7 + $0x1c8] sm:$0xff]
    %v1767 = vld [vmem:[#allocation7 + $0x1d0] sm:$0xff]
    %v1768 = vld [vmem:[#allocation7 + $0x1d8] sm:$0xff]
    %v1769 = vld [vmem:[#allocation7 + $0x1e0] sm:$0xff]
    %v1770 = vld [vmem:[#allocation7 + $0x1e8] sm:$0xff]
    %v1771 = vld [vmem:[#allocation7 + $0x1f0] sm:$0xff]
    %v1772 = vld [vmem:[#allocation7 + $0x1f8] sm:$0xff]
    %v1773 = vld [vmem:[%s4] sm:$0x3]
    %v1775 = vlaneseq
    %v1776 = vshrl.u32 %v1775, 7
    %v1777 = vsub.s32 0, %v1776
    %v1778 = vrot.slane %v1773, %v1777
    %v1779 = vlaneseq
    %v1780 = vshrl.u32 %v1779, 7
    %v1781 = vsub.s32 1, %v1780
    %v1782 = vrot.slane %v1773, %v1781
    %v1849 = vunpack.c.l.b16 %v1709
    %v1850 = vunpack.c.h.b16 %v1709
    %v1851 = vunpack.c.l.b16 %v1710
    %v1852 = vunpack.c.h.b16 %v1710
    %v1853 = vunpack.c.l.b16 %v1711
    %v1854 = vunpack.c.h.b16 %v1711
    %v1855 = vunpack.c.l.b16 %v1712
    %v1856 = vunpack.c.h.b16 %v1712
    %v1857 = vunpack.c.l.b16 %v1713
    %v1858 = vunpack.c.h.b16 %v1713
    %v1859 = vunpack.c.l.b16 %v1714
    %v1860 = vunpack.c.h.b16 %v1714
    %v1861 = vunpack.c.l.b16 %v1715
    %v1862 = vunpack.c.h.b16 %v1715
    %v1863 = vunpack.c.l.b16 %v1716
    %v1864 = vunpack.c.h.b16 %v1716
    %v1865 = vunpack.c.l.b16 %v1717
    %v1866 = vunpack.c.h.b16 %v1717
    %v1867 = vunpack.c.l.b16 %v1718
    %v1868 = vunpack.c.h.b16 %v1718
    %v1869 = vunpack.c.l.b16 %v1719
    %v1870 = vunpack.c.h.b16 %v1719
    %v1871 = vunpack.c.l.b16 %v1720
    %v1872 = vunpack.c.h.b16 %v1720
    %v1873 = vunpack.c.l.b16 %v1721
    %v1874 = vunpack.c.h.b16 %v1721
    %v1875 = vunpack.c.l.b16 %v1722
    %v1876 = vunpack.c.h.b16 %v1722
    %v1877 = vunpack.c.l.b16 %v1723
    %v1878 = vunpack.c.h.b16 %v1723
    %v1879 = vunpack.c.l.b16 %v1724
    %v1880 = vunpack.c.h.b16 %v1724
    %v1881 = vunpack.c.l.b16 %v1725
    %v1882 = vunpack.c.h.b16 %v1725
    %v1883 = vunpack.c.l.b16 %v1726
    %v1884 = vunpack.c.h.b16 %v1726
    %v1885 = vunpack.c.l.b16 %v1727
    %v1886 = vunpack.c.h.b16 %v1727
    %v1887 = vunpack.c.l.b16 %v1728
    %v1888 = vunpack.c.h.b16 %v1728
    %v1889 = vunpack.c.l.b16 %v1729
    %v1890 = vunpack.c.h.b16 %v1729
    %v1891 = vunpack.c.l.b16 %v1730
    %v1892 = vunpack.c.h.b16 %v1730
    %v1893 = vunpack.c.l.b16 %v1731
    %v1894 = vunpack.c.h.b16 %v1731
    %v1895 = vunpack.c.l.b16 %v1732
    %v1896 = vunpack.c.h.b16 %v1732
    %v1897 = vunpack.c.l.b16 %v1733
    %v1898 = vunpack.c.h.b16 %v1733
    %v1899 = vunpack.c.l.b16 %v1734
    %v1900 = vunpack.c.h.b16 %v1734
    %v1901 = vunpack.c.l.b16 %v1735
    %v1902 = vunpack.c.h.b16 %v1735
    %v1903 = vunpack.c.l.b16 %v1736
    %v1904 = vunpack.c.h.b16 %v1736
    %v1905 = vunpack.c.l.b16 %v1737
    %v1906 = vunpack.c.h.b16 %v1737
    %v1907 = vunpack.c.l.b16 %v1738
    %v1908 = vunpack.c.h.b16 %v1738
    %v1909 = vunpack.c.l.b16 %v1739
    %v1910 = vunpack.c.h.b16 %v1739
    %v1911 = vunpack.c.l.b16 %v1740
    %v1912 = vunpack.c.h.b16 %v1740
    %v1913 = vunpack.c.l.b16 %v1741
    %v1914 = vunpack.c.h.b16 %v1741
    %v1915 = vunpack.c.l.b16 %v1742
    %v1916 = vunpack.c.h.b16 %v1742
    %v1917 = vunpack.c.l.b16 %v1743
    %v1918 = vunpack.c.h.b16 %v1743
    %v1919 = vunpack.c.l.b16 %v1744
    %v1920 = vunpack.c.h.b16 %v1744
    %v1921 = vunpack.c.l.b16 %v1745
    %v1922 = vunpack.c.h.b16 %v1745
    %v1923 = vunpack.c.l.b16 %v1746
    %v1924 = vunpack.c.h.b16 %v1746
    %v1925 = vunpack.c.l.b16 %v1747
    %v1926 = vunpack.c.h.b16 %v1747
    %v1927 = vunpack.c.l.b16 %v1748
    %v1928 = vunpack.c.h.b16 %v1748
    %v1929 = vunpack.c.l.b16 %v1749
    %v1930 = vunpack.c.h.b16 %v1749
    %v1931 = vunpack.c.l.b16 %v1750
    %v1932 = vunpack.c.h.b16 %v1750
    %v1933 = vunpack.c.l.b16 %v1751
    %v1934 = vunpack.c.h.b16 %v1751
    %v1935 = vunpack.c.l.b16 %v1752
    %v1936 = vunpack.c.h.b16 %v1752
    %v1937 = vunpack.c.l.b16 %v1753
    %v1938 = vunpack.c.h.b16 %v1753
    %v1939 = vunpack.c.l.b16 %v1754
    %v1940 = vunpack.c.h.b16 %v1754
    %v1941 = vunpack.c.l.b16 %v1755
    %v1942 = vunpack.c.h.b16 %v1755
    %v1943 = vunpack.c.l.b16 %v1756
    %v1944 = vunpack.c.h.b16 %v1756
    %v1945 = vunpack.c.l.b16 %v1757
    %v1946 = vunpack.c.h.b16 %v1757
    %v1947 = vunpack.c.l.b16 %v1758
    %v1948 = vunpack.c.h.b16 %v1758
    %v1949 = vunpack.c.l.b16 %v1759
    %v1950 = vunpack.c.h.b16 %v1759
    %v1951 = vunpack.c.l.b16 %v1760
    %v1952 = vunpack.c.h.b16 %v1760
    %v1953 = vunpack.c.l.b16 %v1761
    %v1954 = vunpack.c.h.b16 %v1761
    %v1955 = vunpack.c.l.b16 %v1762
    %v1956 = vunpack.c.h.b16 %v1762
    %v1957 = vunpack.c.l.b16 %v1763
    %v1958 = vunpack.c.h.b16 %v1763
    %v1959 = vunpack.c.l.b16 %v1764
    %v1960 = vunpack.c.h.b16 %v1764
    %v1961 = vunpack.c.l.b16 %v1765
    %v1962 = vunpack.c.h.b16 %v1765
    %v1963 = vunpack.c.l.b16 %v1766
    %v1964 = vunpack.c.h.b16 %v1766
    %v1965 = vunpack.c.l.b16 %v1767
    %v1966 = vunpack.c.h.b16 %v1767
    %v1967 = vunpack.c.l.b16 %v1768
    %v1968 = vunpack.c.h.b16 %v1768
    %v1969 = vunpack.c.l.b16 %v1769
    %v1970 = vunpack.c.h.b16 %v1769
    %v1971 = vunpack.c.l.b16 %v1770
    %v1972 = vunpack.c.h.b16 %v1770
    %v1973 = vunpack.c.l.b16 %v1771
    %v1974 = vunpack.c.h.b16 %v1771
    %v1975 = vunpack.c.l.b16 %v1772
    %v1976 = vunpack.c.h.b16 %v1772
    %v1977 = vpack.c.b16 %v1851, %v1849
    %v1978 = vpack.c.b16 %v1852, %v1850
    %v1979 = vpack.c.b16 %v1855, %v1853
    %v1980 = vpack.c.b16 %v1856, %v1854
    %v1981 = vpack.c.b16 %v1859, %v1857
    %v1982 = vpack.c.b16 %v1860, %v1858
    %v1983 = vpack.c.b16 %v1863, %v1861
    %v1984 = vpack.c.b16 %v1864, %v1862
    %v1985 = vpack.c.b16 %v1867, %v1865
    %v1986 = vpack.c.b16 %v1868, %v1866
    %v1987 = vpack.c.b16 %v1871, %v1869
    %v1988 = vpack.c.b16 %v1872, %v1870
    %v1989 = vpack.c.b16 %v1875, %v1873
    %v1990 = vpack.c.b16 %v1876, %v1874
    %v1991 = vpack.c.b16 %v1879, %v1877
    %v1992 = vpack.c.b16 %v1880, %v1878
    %v1993 = vpack.c.b16 %v1883, %v1881
    %v1994 = vpack.c.b16 %v1884, %v1882
    %v1995 = vpack.c.b16 %v1887, %v1885
    %v1996 = vpack.c.b16 %v1888, %v1886
    %v1997 = vpack.c.b16 %v1891, %v1889
    %v1998 = vpack.c.b16 %v1892, %v1890
    %v1999 = vpack.c.b16 %v1895, %v1893
    %v2000 = vpack.c.b16 %v1896, %v1894
    %v2001 = vpack.c.b16 %v1899, %v1897
    %v2002 = vpack.c.b16 %v1900, %v1898
    %v2003 = vpack.c.b16 %v1903, %v1901
    %v2004 = vpack.c.b16 %v1904, %v1902
    %v2005 = vpack.c.b16 %v1907, %v1905
    %v2006 = vpack.c.b16 %v1908, %v1906
    %v2007 = vpack.c.b16 %v1911, %v1909
    %v2008 = vpack.c.b16 %v1912, %v1910
    %v2009 = vpack.c.b16 %v1915, %v1913
    %v2010 = vpack.c.b16 %v1916, %v1914
    %v2011 = vpack.c.b16 %v1919, %v1917
    %v2012 = vpack.c.b16 %v1920, %v1918
    %v2013 = vpack.c.b16 %v1923, %v1921
    %v2014 = vpack.c.b16 %v1924, %v1922
    %v2015 = vpack.c.b16 %v1927, %v1925
    %v2016 = vpack.c.b16 %v1928, %v1926
    %v2017 = vpack.c.b16 %v1931, %v1929
    %v2018 = vpack.c.b16 %v1932, %v1930
    %v2019 = vpack.c.b16 %v1935, %v1933
    %v2020 = vpack.c.b16 %v1936, %v1934
    %v2021 = vpack.c.b16 %v1939, %v1937
    %v2022 = vpack.c.b16 %v1940, %v1938
    %v2023 = vpack.c.b16 %v1943, %v1941
    %v2024 = vpack.c.b16 %v1944, %v1942
    %v2025 = vpack.c.b16 %v1947, %v1945
    %v2026 = vpack.c.b16 %v1948, %v1946
    %v2027 = vpack.c.b16 %v1951, %v1949
    %v2028 = vpack.c.b16 %v1952, %v1950
    %v2029 = vpack.c.b16 %v1955, %v1953
    %v2030 = vpack.c.b16 %v1956, %v1954
    %v2031 = vpack.c.b16 %v1959, %v1957
    %v2032 = vpack.c.b16 %v1960, %v1958
    %v2033 = vpack.c.b16 %v1963, %v1961
    %v2034 = vpack.c.b16 %v1964, %v1962
    %v2035 = vpack.c.b16 %v1967, %v1965
    %v2036 = vpack.c.b16 %v1968, %v1966
    %v2037 = vpack.c.b16 %v1971, %v1969
    %v2038 = vpack.c.b16 %v1972, %v1970
    %v2039 = vpack.c.b16 %v1975, %v1973
    %v2040 = vpack.c.b16 %v1976, %v1974
    %2105 = vmatprep.subr.bf16.mxu0 %v1978
    %2106 = vmatpush1.bf16.msra.mxu0 %v1977
    %2107 = vmatprep.subr.bf16.mxu0 %v1980
    %2108 = vmatpush1.bf16.msra.mxu0 %v1979
    %2109 = vmatprep.subr.bf16.mxu0 %v1982
    %2110 = vmatpush1.bf16.msra.mxu0 %v1981
    %2111 = vmatprep.subr.bf16.mxu0 %v1984
    %2112 = vmatpush1.bf16.msra.mxu0 %v1983
    %2113 = vmatprep.subr.bf16.mxu0 %v1986
    %2114 = vmatpush1.bf16.msra.mxu0 %v1985
    %2115 = vmatprep.subr.bf16.mxu0 %v1988
    %2116 = vmatpush1.bf16.msra.mxu0 %v1987
    %2117 = vmatprep.subr.bf16.mxu0 %v1990
    %2118 = vmatpush1.bf16.msra.mxu0 %v1989
    %2119 = vmatprep.subr.bf16.mxu0 %v1992
    %2120 = vmatpush1.bf16.msra.mxu0 %v1991
    %2121 = vmatprep.subr.bf16.mxu0 %v1994
    %2122 = vmatpush1.bf16.msra.mxu0 %v1993
    %2123 = vmatprep.subr.bf16.mxu0 %v1996
    %2124 = vmatpush1.bf16.msra.mxu0 %v1995
    %2125 = vmatprep.subr.bf16.mxu0 %v1998
    %2126 = vmatpush1.bf16.msra.mxu0 %v1997
    %2127 = vmatprep.subr.bf16.mxu0 %v2000
    %2128 = vmatpush1.bf16.msra.mxu0 %v1999
    %2129 = vmatprep.subr.bf16.mxu0 %v2002
    %2130 = vmatpush1.bf16.msra.mxu0 %v2001
    %2131 = vmatprep.subr.bf16.mxu0 %v2004
    %2132 = vmatpush1.bf16.msra.mxu0 %v2003
    %2133 = vmatprep.subr.bf16.mxu0 %v2006
    %2134 = vmatpush1.bf16.msra.mxu0 %v2005
    %2135 = vmatprep.subr.bf16.mxu0 %v2008
    %2136 = vmatpush1.bf16.msra.mxu0 %v2007
    %2137 = vmatprep.mubr.bf16.mxu0 %v1706
    %2138 = vmatmul.mubr.bf16.gmra.mrb[0].mxu0 %v1705
    %v2139 = vpop.f32.mrb[0].mxu0
    %v2140 = vadd.f32 %v1778, %v2139
    %v2141 = vpop.f32.mrb[0].mxu0
    %v2142 = vadd.f32 %v1782, %v2141
    %v2143 = vpop.f32.mrb[0].mxu0
    %v2144 = vpop.f32.mrb[0].mxu0
    %2145 = vdwg.mxu0
    %2146 = vmatprep.subr.bf16.mxu0 %v2010
    %2147 = vmatpush1.bf16.msra.mxu0 %v2009
    %2148 = vmatprep.subr.bf16.mxu0 %v2012
    %2149 = vmatpush1.bf16.msra.mxu0 %v2011
    %2150 = vmatprep.subr.bf16.mxu0 %v2014
    %2151 = vmatpush1.bf16.msra.mxu0 %v2013
    %2152 = vmatprep.subr.bf16.mxu0 %v2016
    %2153 = vmatpush1.bf16.msra.mxu0 %v2015
    %2154 = vmatprep.subr.bf16.mxu0 %v2018
    %2155 = vmatpush1.bf16.msra.mxu0 %v2017
    %2156 = vmatprep.subr.bf16.mxu0 %v2020
    %2157 = vmatpush1.bf16.msra.mxu0 %v2019
    %2158 = vmatprep.subr.bf16.mxu0 %v2022
    %2159 = vmatpush1.bf16.msra.mxu0 %v2021
    %2160 = vmatprep.subr.bf16.mxu0 %v2024
    %2161 = vmatpush1.bf16.msra.mxu0 %v2023
    %2162 = vmatprep.subr.bf16.mxu0 %v2026
    %2163 = vmatpush1.bf16.msra.mxu0 %v2025
    %2164 = vmatprep.subr.bf16.mxu0 %v2028
    %2165 = vmatpush1.bf16.msra.mxu0 %v2027
    %2166 = vmatprep.subr.bf16.mxu0 %v2030
    %2167 = vmatpush1.bf16.msra.mxu0 %v2029
    %2168 = vmatprep.subr.bf16.mxu0 %v2032
    %2169 = vmatpush1.bf16.msra.mxu0 %v2031
    %2170 = vmatprep.subr.bf16.mxu0 %v2034
    %2171 = vmatpush1.bf16.msra.mxu0 %v2033
    %2172 = vmatprep.subr.bf16.mxu0 %v2036
    %2173 = vmatpush1.bf16.msra.mxu0 %v2035
    %2174 = vmatprep.subr.bf16.mxu0 %v2038
    %2175 = vmatpush1.bf16.msra.mxu0 %v2037
    %2176 = vmatprep.subr.bf16.mxu0 %v2040
    %2177 = vmatpush1.bf16.msra.mxu0 %v2039
    %2178 = vmatprep.mubr.bf16.mxu0 %v1708
    %2179 = vmatmul.mubr.bf16.gmra.mrb[0].mxu0 %v1707
    %v2180 = vpop.f32.mrb[0].mxu0
    %v2181 = vadd.f32 %v2140, %v2180
    %v2182 = vpop.f32.mrb[0].mxu0
    %v2183 = vadd.f32 %v2142, %v2182
    %v2184 = vpop.f32.mrb[0].mxu0
    %v2185 = vpop.f32.mrb[0].mxu0
    %2186 = vdwg.mxu0
    %v2187 = vmax.f32 %v2181, 0.0
    %v2188 = vmax.f32 %v2183, 0.0
    %v2189 = vpack.c.bf16 %v2187, %v2187
    %v2190 = vpack.c.bf16 %v2188, %v2188
    %v2191 = vld [vmem:[#allocation8] sm:$0xff]
    %v2192 = vld [vmem:[#allocation8 + $0x8] sm:$0xff]
    %v2193 = vld [vmem:[#allocation8 + $0x10] sm:$0xff]
    %v2194 = vld [vmem:[#allocation8 + $0x18] sm:$0xff]
    %v2195 = vld [vmem:[#allocation8 + $0x20] sm:$0xff]
    %v2196 = vld [vmem:[#allocation8 + $0x28] sm:$0xff]
    %v2197 = vld [vmem:[#allocation8 + $0x30] sm:$0xff]
    %v2198 = vld [vmem:[#allocation8 + $0x38] sm:$0xff]
    %v2199 = vld [vmem:[#allocation8 + $0x40] sm:$0xff]
    %v2200 = vld [vmem:[#allocation8 + $0x48] sm:$0xff]
    %v2201 = vld [vmem:[#allocation8 + $0x50] sm:$0xff]
    %v2202 = vld [vmem:[#allocation8 + $0x58] sm:$0xff]
    %v2203 = vld [vmem:[#allocation8 + $0x60] sm:$0xff]
    %v2204 = vld [vmem:[#allocation8 + $0x68] sm:$0xff]
    %v2205 = vld [vmem:[#allocation8 + $0x70] sm:$0xff]
    %v2206 = vld [vmem:[#allocation8 + $0x78] sm:$0xff]
    %v2207 = vld [vmem:[#allocation8 + $0x80] sm:$0xff]
    %v2208 = vld [vmem:[#allocation8 + $0x88] sm:$0xff]
    %v2209 = vld [vmem:[#allocation8 + $0x90] sm:$0xff]
    %v2210 = vld [vmem:[#allocation8 + $0x98] sm:$0xff]
    %v2211 = vld [vmem:[#allocation8 + $0xa0] sm:$0xff]
    %v2212 = vld [vmem:[#allocation8 + $0xa8] sm:$0xff]
    %v2213 = vld [vmem:[#allocation8 + $0xb0] sm:$0xff]
    %v2214 = vld [vmem:[#allocation8 + $0xb8] sm:$0xff]
    %v2215 = vld [vmem:[#allocation8 + $0xc0] sm:$0xff]
    %v2216 = vld [vmem:[#allocation8 + $0xc8] sm:$0xff]
    %v2217 = vld [vmem:[#allocation8 + $0xd0] sm:$0xff]
    %v2218 = vld [vmem:[#allocation8 + $0xd8] sm:$0xff]
    %v2219 = vld [vmem:[#allocation8 + $0xe0] sm:$0xff]
    %v2220 = vld [vmem:[#allocation8 + $0xe8] sm:$0xff]
    %v2221 = vld [vmem:[#allocation8 + $0xf0] sm:$0xff]
    %v2222 = vld [vmem:[#allocation8 + $0xf8] sm:$0xff]
    %v2223 = vld [vmem:[%s6] sm:$0x3]
    %v2225 = vlaneseq
    %v2226 = vshrl.u32 %v2225, 7
    %v2227 = vsub.s32 0, %v2226
    %v2228 = vrot.slane %v2223, %v2227
    %v2229 = vlaneseq
    %v2230 = vshrl.u32 %v2229, 7
    %v2231 = vsub.s32 1, %v2230
    %v2232 = vrot.slane %v2223, %v2231
    %v2267 = vunpack.c.l.b16 %v2191
    %v2268 = vunpack.c.h.b16 %v2191
    %v2269 = vunpack.c.l.b16 %v2192
    %v2270 = vunpack.c.h.b16 %v2192
    %v2271 = vunpack.c.l.b16 %v2193
    %v2272 = vunpack.c.h.b16 %v2193
    %v2273 = vunpack.c.l.b16 %v2194
    %v2274 = vunpack.c.h.b16 %v2194
    %v2275 = vunpack.c.l.b16 %v2195
    %v2276 = vunpack.c.h.b16 %v2195
    %v2277 = vunpack.c.l.b16 %v2196
    %v2278 = vunpack.c.h.b16 %v2196
    %v2279 = vunpack.c.l.b16 %v2197
    %v2280 = vunpack.c.h.b16 %v2197
    %v2281 = vunpack.c.l.b16 %v2198
    %v2282 = vunpack.c.h.b16 %v2198
    %v2283 = vunpack.c.l.b16 %v2199
    %v2284 = vunpack.c.h.b16 %v2199
    %v2285 = vunpack.c.l.b16 %v2200
    %v2286 = vunpack.c.h.b16 %v2200
    %v2287 = vunpack.c.l.b16 %v2201
    %v2288 = vunpack.c.h.b16 %v2201
    %v2289 = vunpack.c.l.b16 %v2202
    %v2290 = vunpack.c.h.b16 %v2202
    %v2291 = vunpack.c.l.b16 %v2203
    %v2292 = vunpack.c.h.b16 %v2203
    %v2293 = vunpack.c.l.b16 %v2204
    %v2294 = vunpack.c.h.b16 %v2204
    %v2295 = vunpack.c.l.b16 %v2205
    %v2296 = vunpack.c.h.b16 %v2205
    %v2297 = vunpack.c.l.b16 %v2206
    %v2298 = vunpack.c.h.b16 %v2206
    %v2299 = vunpack.c.l.b16 %v2207
    %v2300 = vunpack.c.h.b16 %v2207
    %v2301 = vunpack.c.l.b16 %v2208
    %v2302 = vunpack.c.h.b16 %v2208
    %v2303 = vunpack.c.l.b16 %v2209
    %v2304 = vunpack.c.h.b16 %v2209
    %v2305 = vunpack.c.l.b16 %v2210
    %v2306 = vunpack.c.h.b16 %v2210
    %v2307 = vunpack.c.l.b16 %v2211
    %v2308 = vunpack.c.h.b16 %v2211
    %v2309 = vunpack.c.l.b16 %v2212
    %v2310 = vunpack.c.h.b16 %v2212
    %v2311 = vunpack.c.l.b16 %v2213
    %v2312 = vunpack.c.h.b16 %v2213
    %v2313 = vunpack.c.l.b16 %v2214
    %v2314 = vunpack.c.h.b16 %v2214
    %v2315 = vunpack.c.l.b16 %v2215
    %v2316 = vunpack.c.h.b16 %v2215
    %v2317 = vunpack.c.l.b16 %v2216
    %v2318 = vunpack.c.h.b16 %v2216
    %v2319 = vunpack.c.l.b16 %v2217
    %v2320 = vunpack.c.h.b16 %v2217
    %v2321 = vunpack.c.l.b16 %v2218
    %v2322 = vunpack.c.h.b16 %v2218
    %v2323 = vunpack.c.l.b16 %v2219
    %v2324 = vunpack.c.h.b16 %v2219
    %v2325 = vunpack.c.l.b16 %v2220
    %v2326 = vunpack.c.h.b16 %v2220
    %v2327 = vunpack.c.l.b16 %v2221
    %v2328 = vunpack.c.h.b16 %v2221
    %v2329 = vunpack.c.l.b16 %v2222
    %v2330 = vunpack.c.h.b16 %v2222
    %v2331 = vpack.c.b16 %v2269, %v2267
    %v2332 = vpack.c.b16 %v2270, %v2268
    %v2333 = vpack.c.b16 %v2273, %v2271
    %v2334 = vpack.c.b16 %v2274, %v2272
    %v2335 = vpack.c.b16 %v2277, %v2275
    %v2336 = vpack.c.b16 %v2278, %v2276
    %v2337 = vpack.c.b16 %v2281, %v2279
    %v2338 = vpack.c.b16 %v2282, %v2280
    %v2339 = vpack.c.b16 %v2285, %v2283
    %v2340 = vpack.c.b16 %v2286, %v2284
    %v2341 = vpack.c.b16 %v2289, %v2287
    %v2342 = vpack.c.b16 %v2290, %v2288
    %v2343 = vpack.c.b16 %v2293, %v2291
    %v2344 = vpack.c.b16 %v2294, %v2292
    %v2345 = vpack.c.b16 %v2297, %v2295
    %v2346 = vpack.c.b16 %v2298, %v2296
    %v2347 = vpack.c.b16 %v2301, %v2299
    %v2348 = vpack.c.b16 %v2302, %v2300
    %v2349 = vpack.c.b16 %v2305, %v2303
    %v2350 = vpack.c.b16 %v2306, %v2304
    %v2351 = vpack.c.b16 %v2309, %v2307
    %v2352 = vpack.c.b16 %v2310, %v2308
    %v2353 = vpack.c.b16 %v2313, %v2311
    %v2354 = vpack.c.b16 %v2314, %v2312
    %v2355 = vpack.c.b16 %v2317, %v2315
    %v2356 = vpack.c.b16 %v2318, %v2316
    %v2357 = vpack.c.b16 %v2321, %v2319
    %v2358 = vpack.c.b16 %v2322, %v2320
    %v2359 = vpack.c.b16 %v2325, %v2323
    %v2360 = vpack.c.b16 %v2326, %v2324
    %v2361 = vpack.c.b16 %v2329, %v2327
    %v2362 = vpack.c.b16 %v2330, %v2328
    %2395 = vmatprep.subr.bf16.mxu0 %v2332
    %2396 = vmatpush1.bf16.msra.mxu0 %v2331
    %2397 = vmatprep.subr.bf16.mxu0 %v2334
    %2398 = vmatpush1.bf16.msra.mxu0 %v2333
    %2399 = vmatprep.subr.bf16.mxu0 %v2336
    %2400 = vmatpush1.bf16.msra.mxu0 %v2335
    %2401 = vmatprep.subr.bf16.mxu0 %v2338
    %2402 = vmatpush1.bf16.msra.mxu0 %v2337
    %2403 = vmatprep.subr.bf16.mxu0 %v2340
    %2404 = vmatpush1.bf16.msra.mxu0 %v2339
    %2405 = vmatprep.subr.bf16.mxu0 %v2342
    %2406 = vmatpush1.bf16.msra.mxu0 %v2341
    %2407 = vmatprep.subr.bf16.mxu0 %v2344
    %2408 = vmatpush1.bf16.msra.mxu0 %v2343
    %2409 = vmatprep.subr.bf16.mxu0 %v2346
    %2410 = vmatpush1.bf16.msra.mxu0 %v2345
    %2411 = vmatprep.subr.bf16.mxu0 %v2348
    %2412 = vmatpush1.bf16.msra.mxu0 %v2347
    %2413 = vmatprep.subr.bf16.mxu0 %v2350
    %2414 = vmatpush1.bf16.msra.mxu0 %v2349
    %2415 = vmatprep.subr.bf16.mxu0 %v2352
    %2416 = vmatpush1.bf16.msra.mxu0 %v2351
    %2417 = vmatprep.subr.bf16.mxu0 %v2354
    %2418 = vmatpush1.bf16.msra.mxu0 %v2353
    %2419 = vmatprep.subr.bf16.mxu0 %v2356
    %2420 = vmatpush1.bf16.msra.mxu0 %v2355
    %2421 = vmatprep.subr.bf16.mxu0 %v2358
    %2422 = vmatpush1.bf16.msra.mxu0 %v2357
    %2423 = vmatprep.subr.bf16.mxu0 %v2360
    %2424 = vmatpush1.bf16.msra.mxu0 %v2359
    %2425 = vmatprep.subr.bf16.mxu0 %v2362
    %2426 = vmatpush1.bf16.msra.mxu0 %v2361
    %2427 = vmatprep.mubr.bf16.mxu0 %v2190
    %2428 = vmatmul.mubr.bf16.gmra.mrb[0].mxu0 %v2189
    %v2429 = vpop.f32.mrb[0].mxu0
    %v2430 = vadd.f32 %v2228, %v2429
    %v2431 = vpop.f32.mrb[0].mxu0
    %v2432 = vadd.f32 %v2232, %v2431
    %v2433 = vpop.f32.mrb[0].mxu0
    %v2434 = vpop.f32.mrb[0].mxu0
    %2435 = vdwg.mxu0
    %v2436 = vmax.f32 %v2430, 0.0
    %v2437 = vmax.f32 %v2432, 0.0
    %v2438 = vpack.c.bf16 %v2436, %v2436
    %v2439 = vpack.c.bf16 %v2437, %v2437
    %v2440 = vld [vmem:[#allocation10] sm:$0xf]
    %v2441 = vld [vmem:[#allocation10 + $0x4] sm:$0xf]
    %v2442 = vld [vmem:[#allocation10 + $0x8] sm:$0xf]
    %v2443 = vld [vmem:[#allocation10 + $0xc] sm:$0xf]
    %v2444 = vld [vmem:[#allocation10 + $0x10] sm:$0xf]
    %v2445 = vld [vmem:[#allocation10 + $0x14] sm:$0xf]
    %v2446 = vld [vmem:[#allocation10 + $0x18] sm:$0xf]
    %v2447 = vld [vmem:[#allocation10 + $0x1c] sm:$0xf]
    %v2448 = vld [vmem:[#allocation10 + $0x20] sm:$0xf]
    %v2449 = vld [vmem:[#allocation10 + $0x24] sm:$0xf]
    %v2450 = vld [vmem:[#allocation10 + $0x28] sm:$0xf]
    %v2451 = vld [vmem:[#allocation10 + $0x2c] sm:$0xf]
    %v2452 = vld [vmem:[#allocation10 + $0x30] sm:$0xf]
    %v2453 = vld [vmem:[#allocation10 + $0x34] sm:$0xf]
    %v2454 = vld [vmem:[#allocation10 + $0x38] sm:$0xf]
    %v2455 = vld [vmem:[#allocation10 + $0x3c] sm:$0xf]
    %v2456 = vld [vmem:[#allocation10 + $0x40] sm:$0xf]
    %v2457 = vld [vmem:[#allocation10 + $0x44] sm:$0xf]
    %v2458 = vld [vmem:[#allocation10 + $0x48] sm:$0xf]
    %v2459 = vld [vmem:[#allocation10 + $0x4c] sm:$0xf]
    %v2460 = vld [vmem:[#allocation10 + $0x50] sm:$0xf]
    %v2461 = vld [vmem:[#allocation10 + $0x54] sm:$0xf]
    %v2462 = vld [vmem:[#allocation10 + $0x58] sm:$0xf]
    %v2463 = vld [vmem:[#allocation10 + $0x5c] sm:$0xf]
    %v2464 = vld [vmem:[#allocation10 + $0x60] sm:$0xf]
    %v2465 = vld [vmem:[#allocation10 + $0x64] sm:$0xf]
    %v2466 = vld [vmem:[#allocation10 + $0x68] sm:$0xf]
    %v2467 = vld [vmem:[#allocation10 + $0x6c] sm:$0xf]
    %v2468 = vld [vmem:[#allocation10 + $0x70] sm:$0xf]
    %v2469 = vld [vmem:[#allocation10 + $0x74] sm:$0xf]
    %v2470 = vld [vmem:[#allocation10 + $0x78] sm:$0xf]
    %v2471 = vld [vmem:[#allocation10 + $0x7c] sm:$0xf]
    %v2472 = vld [vmem:[%s8] sm:$0x1]
    %v2474 = vlaneseq
    %v2475 = vshrl.u32 %v2474, 7
    %v2476 = vsub.s32 0, %v2475
    %v2477 = vrot.slane %v2472, %v2476
    %v2511 = vunpack.c.l.b16 %v2440
    %v2512 = vunpack.c.l.b16 %v2441
    %v2513 = vunpack.c.l.b16 %v2442
    %v2514 = vunpack.c.l.b16 %v2443
    %v2515 = vunpack.c.l.b16 %v2444
    %v2516 = vunpack.c.l.b16 %v2445
    %v2517 = vunpack.c.l.b16 %v2446
    %v2518 = vunpack.c.l.b16 %v2447
    %v2519 = vunpack.c.l.b16 %v2448
    %v2520 = vunpack.c.l.b16 %v2449
    %v2521 = vunpack.c.l.b16 %v2450
    %v2522 = vunpack.c.l.b16 %v2451
    %v2523 = vunpack.c.l.b16 %v2452
    %v2524 = vunpack.c.l.b16 %v2453
    %v2525 = vunpack.c.l.b16 %v2454
    %v2526 = vunpack.c.l.b16 %v2455
    %v2527 = vunpack.c.l.b16 %v2456
    %v2528 = vunpack.c.l.b16 %v2457
    %v2529 = vunpack.c.l.b16 %v2458
    %v2530 = vunpack.c.l.b16 %v2459
    %v2531 = vunpack.c.l.b16 %v2460
    %v2532 = vunpack.c.l.b16 %v2461
    %v2533 = vunpack.c.l.b16 %v2462
    %v2534 = vunpack.c.l.b16 %v2463
    %v2535 = vunpack.c.l.b16 %v2464
    %v2536 = vunpack.c.l.b16 %v2465
    %v2537 = vunpack.c.l.b16 %v2466
    %v2538 = vunpack.c.l.b16 %v2467
    %v2539 = vunpack.c.l.b16 %v2468
    %v2540 = vunpack.c.l.b16 %v2469
    %v2541 = vunpack.c.l.b16 %v2470
    %v2542 = vunpack.c.l.b16 %v2471
    %v2543 = vpack.c.b16 %v2512, %v2511
    %v2544 = vpack.c.b16 %v2514, %v2513
    %v2545 = vpack.c.b16 %v2516, %v2515
    %v2546 = vpack.c.b16 %v2518, %v2517
    %v2547 = vpack.c.b16 %v2520, %v2519
    %v2548 = vpack.c.b16 %v2522, %v2521
    %v2549 = vpack.c.b16 %v2524, %v2523
    %v2550 = vpack.c.b16 %v2526, %v2525
    %v2551 = vpack.c.b16 %v2528, %v2527
    %v2552 = vpack.c.b16 %v2530, %v2529
    %v2553 = vpack.c.b16 %v2532, %v2531
    %v2554 = vpack.c.b16 %v2534, %v2533
    %v2555 = vpack.c.b16 %v2536, %v2535
    %v2556 = vpack.c.b16 %v2538, %v2537
    %v2557 = vpack.c.b16 %v2540, %v2539
    %v2558 = vpack.c.b16 %v2542, %v2541
    %2575 = vmatprep.subr.bf16.mxu0 0
    %2576 = vmatpush1.bf16.msra.mxu0 %v2543
    %2577 = vmatprep.subr.bf16.mxu0 0
    %2578 = vmatpush1.bf16.msra.mxu0 %v2544
    %2579 = vmatprep.subr.bf16.mxu0 0
    %2580 = vmatpush1.bf16.msra.mxu0 %v2545
    %2581 = vmatprep.subr.bf16.mxu0 0
    %2582 = vmatpush1.bf16.msra.mxu0 %v2546
    %2583 = vmatprep.subr.bf16.mxu0 0
    %2584 = vmatpush1.bf16.msra.mxu0 %v2547
    %2585 = vmatprep.subr.bf16.mxu0 0
    %2586 = vmatpush1.bf16.msra.mxu0 %v2548
    %2587 = vmatprep.subr.bf16.mxu0 0
    %2588 = vmatpush1.bf16.msra.mxu0 %v2549
    %2589 = vmatprep.subr.bf16.mxu0 0
    %2590 = vmatpush1.bf16.msra.mxu0 %v2550
    %2591 = vmatprep.subr.bf16.mxu0 0
    %2592 = vmatpush1.bf16.msra.mxu0 %v2551
    %2593 = vmatprep.subr.bf16.mxu0 0
    %2594 = vmatpush1.bf16.msra.mxu0 %v2552
    %2595 = vmatprep.subr.bf16.mxu0 0
    %2596 = vmatpush1.bf16.msra.mxu0 %v2553
    %2597 = vmatprep.subr.bf16.mxu0 0
    %2598 = vmatpush1.bf16.msra.mxu0 %v2554
    %2599 = vmatprep.subr.bf16.mxu0 0
    %2600 = vmatpush1.bf16.msra.mxu0 %v2555
    %2601 = vmatprep.subr.bf16.mxu0 0
    %2602 = vmatpush1.bf16.msra.mxu0 %v2556
    %2603 = vmatprep.subr.bf16.mxu0 0
    %2604 = vmatpush1.bf16.msra.mxu0 %v2557
    %2605 = vmatprep.subr.bf16.mxu0 0
    %2606 = vmatpush1.bf16.msra.mxu0 %v2558
    %2607 = vmatprep.mubr.bf16.mxu0 %v2439
    %2608 = vmatmul.mubr.bf16.gmra.mrb[0].mxu0 %v2438
    %v2609 = vpop.f32.mrb[0].mxu0
    %v2610 = vadd.f32 %v2477, %v2609
    %v2611 = vpop.f32.mrb[0].mxu0
    %v2612 = vpop.f32.mrb[0].mxu0
    %v2613 = vpop.f32.mrb[0].mxu0
    %2614 = vdwg.mxu0
    %v2615 = vmax.f32 %v2610, 0.0
    %v2616 = vpack.c.bf16 %v2615, %v2615
    %v2617 = vld [vmem:[#allocation11] sm:$0xf]
    %v2618 = vld [vmem:[#allocation11 + $0x4] sm:$0xf]
    %v2619 = vld [vmem:[#allocation11 + $0x8] sm:$0xf]
    %v2620 = vld [vmem:[#allocation11 + $0xc] sm:$0xf]
    %v2621 = vld [vmem:[#allocation11 + $0x10] sm:$0xf]
    %v2622 = vld [vmem:[#allocation11 + $0x14] sm:$0xf]
    %v2623 = vld [vmem:[#allocation11 + $0x18] sm:$0xf]
    %v2624 = vld [vmem:[#allocation11 + $0x1c] sm:$0xf]
    %v2625 = vld [vmem:[#allocation11 + $0x20] sm:$0xf]
    %v2626 = vld [vmem:[#allocation11 + $0x24] sm:$0xf]
    %v2627 = vld [vmem:[#allocation11 + $0x28] sm:$0xf]
    %v2628 = vld [vmem:[#allocation11 + $0x2c] sm:$0xf]
    %v2629 = vld [vmem:[#allocation11 + $0x30] sm:$0xf]
    %v2630 = vld [vmem:[#allocation11 + $0x34] sm:$0xf]
    %v2631 = vld [vmem:[#allocation11 + $0x38] sm:$0xf]
    %v2632 = vld [vmem:[#allocation11 + $0x3c] sm:$0xf]
    %v2633 = vld [vmem:[%s10] sm:$0x1]
    %v2635 = vlaneseq
    %v2636 = vshrl.u32 %v2635, 7
    %v2637 = vsub.s32 0, %v2636
    %v2638 = vrot.slane %v2633, %v2637
    %v2656 = vunpack.c.l.b16 %v2617
    %v2657 = vunpack.c.l.b16 %v2618
    %v2658 = vunpack.c.l.b16 %v2619
    %v2659 = vunpack.c.l.b16 %v2620
    %v2660 = vunpack.c.l.b16 %v2621
    %v2661 = vunpack.c.l.b16 %v2622
    %v2662 = vunpack.c.l.b16 %v2623
    %v2663 = vunpack.c.l.b16 %v2624
    %v2664 = vunpack.c.l.b16 %v2625
    %v2665 = vunpack.c.l.b16 %v2626
    %v2666 = vunpack.c.l.b16 %v2627
    %v2667 = vunpack.c.l.b16 %v2628
    %v2668 = vunpack.c.l.b16 %v2629
    %v2669 = vunpack.c.l.b16 %v2630
    %v2670 = vunpack.c.l.b16 %v2631
    %v2671 = vunpack.c.l.b16 %v2632
    %v2672 = vpack.c.b16 %v2657, %v2656
    %v2673 = vpack.c.b16 %v2659, %v2658
    %v2674 = vpack.c.b16 %v2661, %v2660
    %v2675 = vpack.c.b16 %v2663, %v2662
    %v2676 = vpack.c.b16 %v2665, %v2664
    %v2677 = vpack.c.b16 %v2667, %v2666
    %v2678 = vpack.c.b16 %v2669, %v2668
    %v2679 = vpack.c.b16 %v2671, %v2670
    %2688 = vmatprep.subr.bf16.mxu0 0
    %2689 = vmatpush1.bf16.msra.mxu0 %v2672
    %2690 = vmatprep.subr.bf16.mxu0 0
    %2691 = vmatpush1.bf16.msra.mxu0 %v2673
    %2692 = vmatprep.subr.bf16.mxu0 0
    %2693 = vmatpush1.bf16.msra.mxu0 %v2674
    %2694 = vmatprep.subr.bf16.mxu0 0
    %2695 = vmatpush1.bf16.msra.mxu0 %v2675
    %2696 = vmatprep.subr.bf16.mxu0 0
    %2697 = vmatpush1.bf16.msra.mxu0 %v2676
    %2698 = vmatprep.subr.bf16.mxu0 0
    %2699 = vmatpush1.bf16.msra.mxu0 %v2677
    %2700 = vmatprep.subr.bf16.mxu0 0
    %2701 = vmatpush1.bf16.msra.mxu0 %v2678
    %2702 = vmatprep.subr.bf16.mxu0 0
    %2703 = vmatpush1.bf16.msra.mxu0 %v2679
    %2704 = vmatprep.subr.bf16.mxu0 0
    %2705 = vmatpush1.bf16.msra.mxu0 0
    %2706 = vmatprep.subr.bf16.mxu0 0
    %2707 = vmatpush1.bf16.msra.mxu0 0
    %2708 = vmatprep.subr.bf16.mxu0 0
    %2709 = vmatpush1.bf16.msra.mxu0 0
    %2710 = vmatprep.subr.bf16.mxu0 0
    %2711 = vmatpush1.bf16.msra.mxu0 0
    %2712 = vmatprep.subr.bf16.mxu0 0
    %2713 = vmatpush1.bf16.msra.mxu0 0
    %2714 = vmatprep.subr.bf16.mxu0 0
    %2715 = vmatpush1.bf16.msra.mxu0 0
    %2716 = vmatprep.subr.bf16.mxu0 0
    %2717 = vmatpush1.bf16.msra.mxu0 0
    %2718 = vmatprep.subr.bf16.mxu0 0
    %2719 = vmatpush1.bf16.msra.mxu0 0
    %2720 = vmatprep.mubr.bf16.mxu0 0
    %2721 = vmatmul.mubr.bf16.gmra.mrb[0].mxu0 %v2616
    %v2722 = vpop.f32.mrb[0].mxu0
    %v2723 = vadd.f32 %v2638, %v2722
    %v2724 = vpop.f32.mrb[0].mxu0
    %v2725 = vpop.f32.mrb[0].mxu0
    %v2726 = vpop.f32.mrb[0].mxu0
    %2727 = vdwg.mxu0
    %2728 = vst [vmem:[#allocation13] sm:$0x3] %v2723
    // Predicated region
    $region70: #{tpu_custom_call.1} parent=1 // pred_check
      _
    $region71: #{tpu_custom_call.1} parent=1 // pred_check_branch
      %2730 = sbr.rel (0) target = $region73
    $region72: #{tpu_custom_call.1} parent=1 // pred_region
      %s2732 = ssub.s32 32, 32
      %2733 = vsyncadd [#allocation4], %s2732
      %s2735 = sshll.u32 [#allocation13], 4
      %s2736 = int_to_ptr.vmem [resolvable:$true] %s2735
      %2738 = dma.vmem_to_hbm [thread:$0]  %s2736, 32, %s11, [#allocation4]
    $region73: #{tpu_custom_call.1} parent=1 // pred_fallthru
      _
    // Predicated region
    $region74: #{tpu_custom_call.1} parent=1 // pred_check
      _
    $region75: #{tpu_custom_call.1} parent=1 // pred_check_branch
      %2740 = sbr.rel (0) target = $region77
    $region76: #{tpu_custom_call.1} parent=1 // pred_region
      %2741 = dma.done [#allocation4], 32
    $region77: #{tpu_custom_call.1} parent=1 // pred_fallthru
      _
    %2742 = vsyncpa [#allocation3], 1
    %2743 = vsyncpa [#allocation6], 1
    %2744 = vsyncpa [#allocation9], 1
    %2745 = vsyncpa [#allocation12], 1
    %2746 = vsyncpa [#allocation4], 1

</llo_original>
